<compile_context>
chip_gen: v7x
topology: tpu7x:2x2x1
jax: 0.10.0
libtpu: 0.0.40
codegen_flags: <defaults>
</compile_context>

<pallas_src>
import numpy as np
import jax
import jax.numpy as jnp
from jax import lax
from jax.experimental import pallas as pl

NJ = 21          # keypoints
NV = 778         # MANO vertices
PAD = 128        # lane-aligned start of the second block in fused matrices
W2 = PAD + NJ    # fused-matrix width (kpts block @ lane 0, second block @ lane 128)

# MANO 21-keypoint kinematic tree (wrist + 4 joints per finger incl. tips).
PARENTS = [None, 0, 1, 2, 0, 4, 5, 0, 7, 8, 0, 10, 11, 0, 13, 14,
           3, 6, 9, 12, 15]
# MANO keypoint order -> MPII keypoint order (standard mapping).
MANO2MPII = [0, 13, 14, 15, 16, 1, 2, 3, 17, 4, 5, 6, 18, 10, 11, 12,
             19, 7, 8, 9, 20]


# ----------------------------------------------------------------------------
# Pallas kernel: the whole MANOModel.forward() hot path (transposed layout).
# ----------------------------------------------------------------------------
def _mano_kernel(theta_ref, beta_blk_ref, vmean_ref, sb_ref, rbconst_ref,
                 rbmat_ref, akmat_ref, w_ref, factor12_ref, factor3_ref,
                 t_ref, joints_ref, verts_ref):
    f32 = jnp.float32

    # --- axis-angle -> rotation-matrix entries; each entry is a (1, NJ) row.
    tx = theta_ref[0:1, :]
    ty = theta_ref[1:2, :]
    tz = theta_ref[2:3, :]
    sq = tx * tx + ty * ty + tz * tz
    inv_n = lax.rsqrt(jnp.maximum(sq, jnp.float32(1e-16)))   # EUP; zero-safe
    n = sq * inv_n                                           # ||theta||
    c = jnp.cos(n)
    s = jnp.sin(n)
    tt = 1.0 - c
    x = tx * inv_n
    y = ty * inv_n
    z = tz * inv_n
    r00 = tt * x * x + c
    r01 = tt * x * y - z * s
    r02 = tt * x * z + y * s
    r10 = tt * x * y + z * s
    r11 = tt * y * y + c
    r12 = tt * y * z - x * s
    r20 = tt * x * z - y * s
    r21 = tt * y * z + x * s
    r22 = tt * z * z + c

    def rot_apply(v0, v1, v2):
        # einsum('jhw,jw->jh') with joints on the lane axis (pure VPU FMAs).
        return (r00 * v0 + r01 * v1 + r02 * v2,
                r10 * v0 + r11 * v1 + r12 * v2,
                r20 * v0 + r21 * v1 + r22 * v2)

    # --- blend shapes (rest pose for LBS): verts0^T (3, 778)
    verts0 = vmean_ref[...] + jnp.dot(beta_blk_ref[...], sb_ref[...],
                                      preferred_element_type=f32)

    # --- {ref_kpts | bones} in ONE fused matmul; j_regressor folded offline.
    rb = rbconst_ref[...] + jnp.dot(beta_blk_ref[...], rbmat_ref[...],
                                    preferred_element_type=f32)    # (3, W2)
    ref_kpts = rb[:, 0:NJ]
    bones = rb[:, PAD:W2]

    # --- rotate bones, then {kpts | MPII-permuted kpts} in ONE fused matmul.
    br0, br1, br2 = rot_apply(bones[0:1, :], bones[1:2, :], bones[2:3, :])
    row3 = jnp.concatenate([br0, br1, br2], axis=0)                # (3, NJ)
    kj = jnp.dot(row3, akmat_ref[...], preferred_element_type=f32)  # (3, W2)
    kpts = kj[:, 0:NJ]
    joints_pre = kj[:, PAD:W2]

    rk0, rk1, rk2 = rot_apply(ref_kpts[0:1, :], ref_kpts[1:2, :],
                              ref_kpts[2:3, :])
    jv0 = kpts[0:1, :] - rk0
    jv1 = kpts[1:2, :] - rk1
    jv2 = kpts[2:3, :] - rk2

    # --- LBS: rows grouped per source column so T splits into contiguous
    #     (3, 778) blocks; the +-1/rel_scale factor is folded on 21-lane data.
    g12 = jnp.concatenate([r00, r10, r20,
                           r01, r11, r21,
                           r02, r12, r22,
                           jv0, jv1, jv2], axis=0) * factor12_ref[...]  # (12, NJ)
    T = jnp.dot(g12, w_ref[...], preferred_element_type=f32)            # (12, 778)

    # --- global transform: x * factor + off, off = t - root * factor
    factor3 = factor3_ref[...]                 # (3, 1)
    off = t_ref[...] - kpts[:, 0:1] * factor3  # (3, 1)

    joints_ref[...] = joints_pre * factor3 + off

    posed = (T[0:3, :] * verts0[0:1, :]
             + T[3:6, :] * verts0[1:2, :]
             + T[6:9, :] * verts0[2:3, :]
             + T[9:12, :])                     # (3, 778); factor already folded
    verts_ref[...] = posed + off


# ----------------------------------------------------------------------------
# Wrapper: fold static matrices / regressor contractions at build time, call
# the single-block kernel, transpose lane-dense outputs back to torch layout.
# ----------------------------------------------------------------------------
def _static_tree_mats():
    B = np.eye(NJ, dtype=np.float32)          # kpts -> bones
    A = np.zeros((NJ, NJ), dtype=np.float32)  # bones -> kpts (ancestor sum)
    for ci, pi in enumerate(PARENTS):
        if pi is not None:
            B[ci, pi] -= 1.0
        a = ci
        while a is not None:
            A[ci, a] = 1.0
            a = PARENTS[a]
    P = np.zeros((NJ, NJ), dtype=np.float32)  # MANO -> MPII column permutation
    for i, m in enumerate(MANO2MPII):
        P[m, i] = 1.0
    return B, A, P


def mano_forward(theta, beta, t, t_sil, rel_scale,
                 verts_mean, shape_basis, j_regressor, weights):
    f32 = jnp.float32

    theta_t = theta.astype(f32).T                                    # (3, 21)
    # beta block: beta_blk[d, 10*d + c] = beta[c] -> blend shape is one matmul
    beta_blk = jnp.kron(jnp.eye(3, dtype=f32),
                        beta.astype(f32).reshape(1, 10))             # (3, 30)
    vmean_t = verts_mean.astype(f32).T                               # (3, 778)
    # SB^T[10*d + c, v] = shape_basis[v, d, c]
    sb_t = shape_basis.astype(f32).transpose(1, 2, 0).reshape(30, NV)
    jreg_t = j_regressor.astype(f32).T                               # (778, 21)
    w_t = weights.astype(f32).T                                      # (21, 778)

    B, A, P = _static_tree_mats()
    B_t = jnp.asarray(B.T)
    A_t = jnp.asarray(A.T)
    AP_t = jnp.asarray(A.T @ P)

    # Model-constant regressor contractions (trace-time; removes the 778-wide
    # j_regressor operand from the kernel entirely).
    vmean_jreg = vmean_t @ jreg_t        # (3, 21)
    sbjreg = sb_t @ jreg_t               # (30, 21)

    # Fused right-hand matrices; second block starts at lane 128 so both
    # in-kernel slices are vreg-aligned.
    rbconst = jnp.zeros((3, W2), f32)
    rbconst = rbconst.at[:, :NJ].set(vmean_jreg).at[:, PAD:].set(vmean_jreg @ B_t)
    rbmat = jnp.zeros((30, W2), f32)
    rbmat = rbmat.at[:, :NJ].set(sbjreg).at[:, PAD:].set(sbjreg @ B_t)
    akmat = jnp.zeros((NJ, W2), f32)
    akmat = akmat.at[:, :NJ].set(A_t).at[:, PAD:].set(AP_t)

    factor3 = jnp.array([[-1.0], [-1.0], [1.0]], f32) / jnp.float32(rel_scale)
    factor12 = jnp.tile(factor3, (4, 1))                             # (12, 1)
    t_t = t.astype(f32).reshape(3, 1)

    inputs = (theta_t, beta_blk, vmean_t, sb_t, rbconst, rbmat, akmat, w_t,
              factor12, factor3, t_t)

    out_shape = (jax.ShapeDtypeStruct((3, NJ), f32),
                 jax.ShapeDtypeStruct((3, NV), f32))

    # Single-block call: no grid, whole arrays resident in VMEM (<< 1 MiB).
    joints_t, verts_t = pl.pallas_call(_mano_kernel, out_shape=out_shape)(*inputs)

    joints = joints_t.T                               # (21, 3)
    verts = verts_t.T                                 # (778, 3)
    verts_sil = verts + t_sil.astype(f32).reshape(1, 3)   # tiny XLA add
    return joints, verts, verts_sil

# TODO(synk): for multi-hand / multi-frame optimization, add a leading batch
# grid axis (per-batch theta/beta/t blocks; constant operands pinned to block
# 0) marked "parallel" so launch/DMA overhead amortizes and v7x's two
# TensorCores are both used; optionally cast sb_t/w_t to bf16 for v5e HBM BW.


# ----------------------------------------------------------------------------
# Pure-numpy reference mirroring the torch code (for a sanity check).
# ----------------------------------------------------------------------------
def np_reference(theta, beta, t, t_sil, rel_scale,
                 verts_mean, shape_basis, j_regressor, weights):
    theta = np.asarray(theta, np.float32)
    beta = np.asarray(beta, np.float32)
    t = np.asarray(t, np.float32)
    t_sil = np.asarray(t_sil, np.float32)
    verts_mean = np.asarray(verts_mean, np.float32)
    shape_basis = np.asarray(shape_basis, np.float32)
    j_regressor = np.asarray(j_regressor, np.float32)
    weights = np.asarray(weights, np.float32)

    n = np.linalg.norm(theta, axis=-1, keepdims=True)
    c = np.cos(n)
    s = np.sin(n)
    tt = 1 - c
    u = theta / n
    x, y, z = u[:, 0:1], u[:, 1:2], u[:, 2:3]
    R = np.stack([tt * x * x + c, tt * x * y - z * s, tt * x * z + y * s,
                  tt * x * y + z * s, tt * y * y + c, tt * y * z - x * s,
                  tt * x * z - y * s, tt * y * z + x * s, tt * z * z + c],
                 axis=1).reshape(-1, 3, 3)

    verts = verts_mean + np.einsum('c,vdc->vd', beta, shape_basis)
    ref_kpts = np.einsum('vd,jv->jd', verts, j_regressor)

    bones = []
    for ci, pi in enumerate(PARENTS):
        bones.append(ref_kpts[ci] if pi is None else ref_kpts[ci] - ref_kpts[pi])
    bones = np.stack(bones)
    bones = np.einsum('jhw,jw->jh', R, bones)
    kpts = []
    for ci, pi in enumerate(PARENTS):
        kpts.append(bones[ci] if pi is None else bones[ci] + kpts[pi])
    kpts = np.stack(kpts)

    jvec = kpts - np.einsum('jhw,jw->jh', R, ref_kpts)
    g = np.concatenate([R, jvec[:, :, None]], -1)
    vh = np.concatenate([verts, np.ones((NV, 1), np.float32)], -1)
    verts_p = np.einsum('vj,jvd->vd', weights, np.einsum('jhw,vw->jvh', g, vh))

    joints = (kpts[MANO2MPII] - kpts[0]) / rel_scale
    joints[:, 0:2] *= -1
    joints = joints + t
    verts_o = (verts_p - kpts[0]) / rel_scale
    verts_o[:, 0:2] *= -1
    verts_o = verts_o + t
    return joints, verts_o, verts_o + t_sil


if __name__ == "__main__":
    key = jax.random.PRNGKey(0)
    ks = jax.random.split(key, 8)
    f32 = jnp.float32

    # nn.Parameter-equivalents (random nonzero theta so ||theta|| != 0,
    # matching the NaN-free operating regime of the torch code).
    theta = jax.random.normal(ks[0], (NJ, 3), f32) * 0.1
    beta = jax.random.normal(ks[1], (10,), f32) * 0.1
    t = jax.random.normal(ks[2], (3,), f32) * 0.01
    t_sil = jax.random.normal(ks[3], (3,), f32) * 0.01
    rel_scale = 1.0

    # Synthetic stand-ins for MANO_RIGHT.pkl contents (deterministic).
    verts_mean = jax.random.normal(ks[4], (NV, 3), f32) * 0.1
    shape_basis = jax.random.normal(ks[5], (NV, 3, 10), f32) * 0.01
    j_regressor = jax.nn.softmax(jax.random.normal(ks[6], (NJ, NV), f32),
                                 axis=-1)
    weights = jax.nn.softmax(jax.random.normal(ks[7], (NV, NJ), f32), axis=-1)

    joints, verts, verts_sil = mano_forward(
        theta, beta, t, t_sil, rel_scale,
        verts_mean, shape_basis, j_regressor, weights)
    jax.block_until_ready((joints, verts, verts_sil))

    # Sanity check against a pure-numpy re-implementation of the torch code.
    j_ref, v_ref, vs_ref = np_reference(
        theta, beta, t, t_sil, rel_scale,
        verts_mean, shape_basis, j_regressor, weights)
    ok = (np.allclose(np.asarray(joints), j_ref, rtol=1e-2, atol=1e-3)
          and np.allclose(np.asarray(verts), v_ref, rtol=1e-2, atol=1e-3)
          and np.allclose(np.asarray(verts_sil), vs_ref, rtol=1e-2, atol=1e-3))
    assert ok, "Pallas kernel output mismatch vs reference"
    print("KERNEL_OK")

# TODO(synk): MANOModel.loss() (pytorch3d perspective projection + soft
# silhouette rasterization, cv2.imwrite, L1/reg losses) is outside forward()
# and is not translated here.
</pallas_src>

<mosaic_0001>
module attributes {stable_mosaic.version = 11 : i64} {
  func.func @_mano_kernel(%arg0: memref<3x21xf32, #tpu.memory_space<vmem>>, %arg1: memref<3x30xf32, #tpu.memory_space<vmem>>, %arg2: memref<3x778xf32, #tpu.memory_space<vmem>>, %arg3: memref<30x778xf32, #tpu.memory_space<vmem>>, %arg4: memref<3x149xf32, #tpu.memory_space<vmem>>, %arg5: memref<30x149xf32, #tpu.memory_space<vmem>>, %arg6: memref<21x149xf32, #tpu.memory_space<vmem>>, %arg7: memref<21x778xf32, #tpu.memory_space<vmem>>, %arg8: memref<12x1xf32, #tpu.memory_space<vmem>>, %arg9: memref<3x1xf32, #tpu.memory_space<vmem>>, %arg10: memref<3x1xf32, #tpu.memory_space<vmem>>, %arg11: memref<3x21xf32, #tpu.memory_space<vmem>>, %arg12: memref<3x778xf32, #tpu.memory_space<vmem>>) attributes {dimension_semantics = [], scalar_prefetch = 0 : i64, scratch_operands = 0 : i64, tpu.core_type = #tpu.core_type<tc>} {
    %c0 = arith.constant 0 : index
    %c0_0 = arith.constant 0 : index
    %0 = vector.load %arg0[%c0, %c0_0] : memref<3x21xf32, #tpu.memory_space<vmem>>, vector<1x21xf32>
    %c1 = arith.constant 1 : index
    %c0_1 = arith.constant 0 : index
    %1 = vector.load %arg0[%c1, %c0_1] : memref<3x21xf32, #tpu.memory_space<vmem>>, vector<1x21xf32>
    %c2 = arith.constant 2 : index
    %c0_2 = arith.constant 0 : index
    %2 = vector.load %arg0[%c2, %c0_2] : memref<3x21xf32, #tpu.memory_space<vmem>>, vector<1x21xf32>
    %3 = arith.mulf %0, %0 : vector<1x21xf32>
    %4 = arith.mulf %1, %1 : vector<1x21xf32>
    %5 = arith.addf %3, %4 : vector<1x21xf32>
    %6 = arith.mulf %2, %2 : vector<1x21xf32>
    %7 = arith.addf %5, %6 : vector<1x21xf32>
    %cst = arith.constant 1.000000e-16 : f32
    %8 = vector.broadcast %cst : f32 to vector<1x21xf32>
    %9 = arith.maximumf %7, %8 : vector<1x21xf32>
    %10 = math.rsqrt %9 : vector<1x21xf32>
    %11 = arith.mulf %7, %10 : vector<1x21xf32>
    %12 = math.cos %11 : vector<1x21xf32>
    %13 = math.sin %11 : vector<1x21xf32>
    %cst_3 = arith.constant 1.000000e+00 : f32
    %14 = vector.broadcast %cst_3 : f32 to vector<1x21xf32>
    %15 = arith.subf %14, %12 : vector<1x21xf32>
    %16 = arith.mulf %0, %10 : vector<1x21xf32>
    %17 = arith.mulf %1, %10 : vector<1x21xf32>
    %18 = arith.mulf %2, %10 : vector<1x21xf32>
    %19 = arith.mulf %15, %16 : vector<1x21xf32>
    %20 = arith.mulf %19, %16 : vector<1x21xf32>
    %21 = arith.addf %20, %12 : vector<1x21xf32>
    %22 = arith.mulf %15, %16 : vector<1x21xf32>
    %23 = arith.mulf %22, %17 : vector<1x21xf32>
    %24 = arith.mulf %18, %13 : vector<1x21xf32>
    %25 = arith.subf %23, %24 : vector<1x21xf32>
    %26 = arith.mulf %15, %16 : vector<1x21xf32>
    %27 = arith.mulf %26, %18 : vector<1x21xf32>
    %28 = arith.mulf %17, %13 : vector<1x21xf32>
    %29 = arith.addf %27, %28 : vector<1x21xf32>
    %30 = arith.mulf %15, %16 : vector<1x21xf32>
    %31 = arith.mulf %30, %17 : vector<1x21xf32>
    %32 = arith.mulf %18, %13 : vector<1x21xf32>
    %33 = arith.addf %31, %32 : vector<1x21xf32>
    %34 = arith.mulf %15, %17 : vector<1x21xf32>
    %35 = arith.mulf %34, %17 : vector<1x21xf32>
    %36 = arith.addf %35, %12 : vector<1x21xf32>
    %37 = arith.mulf %15, %17 : vector<1x21xf32>
    %38 = arith.mulf %37, %18 : vector<1x21xf32>
    %39 = arith.mulf %16, %13 : vector<1x21xf32>
    %40 = arith.subf %38, %39 : vector<1x21xf32>
    %41 = arith.mulf %15, %16 : vector<1x21xf32>
    %42 = arith.mulf %41, %18 : vector<1x21xf32>
    %43 = arith.mulf %17, %13 : vector<1x21xf32>
    %44 = arith.subf %42, %43 : vector<1x21xf32>
    %45 = arith.mulf %15, %17 : vector<1x21xf32>
    %46 = arith.mulf %45, %18 : vector<1x21xf32>
    %47 = arith.mulf %16, %13 : vector<1x21xf32>
    %48 = arith.addf %46, %47 : vector<1x21xf32>
    %49 = arith.mulf %15, %18 : vector<1x21xf32>
    %50 = arith.mulf %49, %18 : vector<1x21xf32>
    %51 = arith.addf %50, %12 : vector<1x21xf32>
    %c0_4 = arith.constant 0 : index
    %c0_5 = arith.constant 0 : index
    %52 = vector.load %arg2[%c0_4, %c0_5] : memref<3x778xf32, #tpu.memory_space<vmem>>, vector<3x778xf32>
    %c0_6 = arith.constant 0 : index
    %c0_7 = arith.constant 0 : index
    %53 = vector.load %arg1[%c0_6, %c0_7] : memref<3x30xf32, #tpu.memory_space<vmem>>, vector<3x30xf32>
    %c0_8 = arith.constant 0 : index
    %c0_9 = arith.constant 0 : index
    %54 = vector.load %arg3[%c0_8, %c0_9] : memref<30x778xf32, #tpu.memory_space<vmem>>, vector<30x778xf32>
    %cst_10 = arith.constant dense<0.000000e+00> : vector<3x778xf32>
    %55 = tpu.matmul %53, %54, %cst_10 {dimension_numbers = #tpu.dot_dimension_numbers<[1], [0], [0], [1], [0, 0, 1, 1], [], []>} : vector<3x30xf32>, vector<30x778xf32>, vector<3x778xf32> -> vector<3x778xf32>
    %56 = arith.addf %52, %55 : vector<3x778xf32>
    %c0_11 = arith.constant 0 : index
    %c0_12 = arith.constant 0 : index
    %57 = vector.load %arg4[%c0_11, %c0_12] : memref<3x149xf32, #tpu.memory_space<vmem>>, vector<3x149xf32>
    %c0_13 = arith.constant 0 : index
    %c0_14 = arith.constant 0 : index
    %58 = vector.load %arg1[%c0_13, %c0_14] : memref<3x30xf32, #tpu.memory_space<vmem>>, vector<3x30xf32>
    %c0_15 = arith.constant 0 : index
    %c0_16 = arith.constant 0 : index
    %59 = vector.load %arg5[%c0_15, %c0_16] : memref<30x149xf32, #tpu.memory_space<vmem>>, vector<30x149xf32>
    %cst_17 = arith.constant dense<0.000000e+00> : vector<3x149xf32>
    %60 = tpu.matmul %58, %59, %cst_17 {dimension_numbers = #tpu.dot_dimension_numbers<[1], [0], [0], [1], [0, 0, 1, 1], [], []>} : vector<3x30xf32>, vector<30x149xf32>, vector<3x149xf32> -> vector<3x149xf32>
    %61 = arith.addf %57, %60 : vector<3x149xf32>
    %62 = vector.extract_strided_slice %61 {offsets = [0, 0], sizes = [3, 21], strides = [1, 1]} : vector<3x149xf32> to vector<3x21xf32>
    %63 = vector.extract_strided_slice %61 {offsets = [0, 128], sizes = [3, 21], strides = [1, 1]} : vector<3x149xf32> to vector<3x21xf32>
    %64 = vector.extract_strided_slice %63 {offsets = [0, 0], sizes = [1, 21], strides = [1, 1]} : vector<3x21xf32> to vector<1x21xf32>
    %65 = vector.extract_strided_slice %63 {offsets = [1, 0], sizes = [1, 21], strides = [1, 1]} : vector<3x21xf32> to vector<1x21xf32>
    %66 = vector.extract_strided_slice %63 {offsets = [2, 0], sizes = [1, 21], strides = [1, 1]} : vector<3x21xf32> to vector<1x21xf32>
    %67 = arith.mulf %21, %64 : vector<1x21xf32>
    %68 = arith.mulf %25, %65 : vector<1x21xf32>
    %69 = arith.addf %67, %68 : vector<1x21xf32>
    %70 = arith.mulf %29, %66 : vector<1x21xf32>
    %71 = arith.addf %69, %70 : vector<1x21xf32>
    %72 = arith.mulf %33, %64 : vector<1x21xf32>
    %73 = arith.mulf %36, %65 : vector<1x21xf32>
    %74 = arith.addf %72, %73 : vector<1x21xf32>
    %75 = arith.mulf %40, %66 : vector<1x21xf32>
    %76 = arith.addf %74, %75 : vector<1x21xf32>
    %77 = arith.mulf %44, %64 : vector<1x21xf32>
    %78 = arith.mulf %48, %65 : vector<1x21xf32>
    %79 = arith.addf %77, %78 : vector<1x21xf32>
    %80 = arith.mulf %51, %66 : vector<1x21xf32>
    %81 = arith.addf %79, %80 : vector<1x21xf32>
    %82 = tpu.concatenate %71, %76, %81 in 0 : vector<1x21xf32>, vector<1x21xf32>, vector<1x21xf32> -> vector<3x21xf32>
    %c0_18 = arith.constant 0 : index
    %c0_19 = arith.constant 0 : index
    %83 = vector.load %arg6[%c0_18, %c0_19] : memref<21x149xf32, #tpu.memory_space<vmem>>, vector<21x149xf32>
    %cst_20 = arith.constant dense<0.000000e+00> : vector<3x149xf32>
    %84 = tpu.matmul %82, %83, %cst_20 {dimension_numbers = #tpu.dot_dimension_numbers<[1], [0], [0], [1], [0, 0, 1, 1], [], []>} : vector<3x21xf32>, vector<21x149xf32>, vector<3x149xf32> -> vector<3x149xf32>
    %85 = vector.extract_strided_slice %84 {offsets = [0, 0], sizes = [3, 21], strides = [1, 1]} : vector<3x149xf32> to vector<3x21xf32>
    %86 = vector.extract_strided_slice %84 {offsets = [0, 128], sizes = [3, 21], strides = [1, 1]} : vector<3x149xf32> to vector<3x21xf32>
    %87 = vector.extract_strided_slice %62 {offsets = [0, 0], sizes = [1, 21], strides = [1, 1]} : vector<3x21xf32> to vector<1x21xf32>
    %88 = vector.extract_strided_slice %62 {offsets = [1, 0], sizes = [1, 21], strides = [1, 1]} : vector<3x21xf32> to vector<1x21xf32>
    %89 = vector.extract_strided_slice %62 {offsets = [2, 0], sizes = [1, 21], strides = [1, 1]} : vector<3x21xf32> to vector<1x21xf32>
    %90 = arith.mulf %21, %87 : vector<1x21xf32>
    %91 = arith.mulf %25, %88 : vector<1x21xf32>
    %92 = arith.addf %90, %91 : vector<1x21xf32>
    %93 = arith.mulf %29, %89 : vector<1x21xf32>
    %94 = arith.addf %92, %93 : vector<1x21xf32>
    %95 = arith.mulf %33, %87 : vector<1x21xf32>
    %96 = arith.mulf %36, %88 : vector<1x21xf32>
    %97 = arith.addf %95, %96 : vector<1x21xf32>
    %98 = arith.mulf %40, %89 : vector<1x21xf32>
    %99 = arith.addf %97, %98 : vector<1x21xf32>
    %100 = arith.mulf %44, %87 : vector<1x21xf32>
    %101 = arith.mulf %48, %88 : vector<1x21xf32>
    %102 = arith.addf %100, %101 : vector<1x21xf32>
    %103 = arith.mulf %51, %89 : vector<1x21xf32>
    %104 = arith.addf %102, %103 : vector<1x21xf32>
    %105 = vector.extract_strided_slice %85 {offsets = [0, 0], sizes = [1, 21], strides = [1, 1]} : vector<3x21xf32> to vector<1x21xf32>
    %106 = arith.subf %105, %94 : vector<1x21xf32>
    %107 = vector.extract_strided_slice %85 {offsets = [1, 0], sizes = [1, 21], strides = [1, 1]} : vector<3x21xf32> to vector<1x21xf32>
    %108 = arith.subf %107, %99 : vector<1x21xf32>
    %109 = vector.extract_strided_slice %85 {offsets = [2, 0], sizes = [1, 21], strides = [1, 1]} : vector<3x21xf32> to vector<1x21xf32>
    %110 = arith.subf %109, %104 : vector<1x21xf32>
    %111 = tpu.concatenate %21, %33, %44, %25, %36, %48, %29, %40, %51, %106, %108, %110 in 0 : vector<1x21xf32>, vector<1x21xf32>, vector<1x21xf32>, vector<1x21xf32>, vector<1x21xf32>, vector<1x21xf32>, vector<1x21xf32>, vector<1x21xf32>, vector<1x21xf32>, vector<1x21xf32>, vector<1x21xf32>, vector<1x21xf32> -> vector<12x21xf32>
    %c0_21 = arith.constant 0 : index
    %c0_22 = arith.constant 0 : index
    %112 = vector.load %arg8[%c0_21, %c0_22] : memref<12x1xf32, #tpu.memory_space<vmem>>, vector<12x1xf32>
    %113 = vector.broadcast %112 : vector<12x1xf32> to vector<12x21xf32>
    %114 = arith.mulf %111, %113 : vector<12x21xf32>
    %c0_23 = arith.constant 0 : index
    %c0_24 = arith.constant 0 : index
    %115 = vector.load %arg7[%c0_23, %c0_24] : memref<21x778xf32, #tpu.memory_space<vmem>>, vector<21x778xf32>
    %cst_25 = arith.constant dense<0.000000e+00> : vector<12x778xf32>
    %116 = tpu.matmul %114, %115, %cst_25 {dimension_numbers = #tpu.dot_dimension_numbers<[1], [0], [0], [1], [0, 0, 1, 1], [], []>} : vector<12x21xf32>, vector<21x778xf32>, vector<12x778xf32> -> vector<12x778xf32>
    %c0_26 = arith.constant 0 : index
    %c0_27 = arith.constant 0 : index
    %117 = vector.load %arg9[%c0_26, %c0_27] : memref<3x1xf32, #tpu.memory_space<vmem>>, vector<3x1xf32>
    %c0_28 = arith.constant 0 : index
    %c0_29 = arith.constant 0 : index
    %118 = vector.load %arg10[%c0_28, %c0_29] : memref<3x1xf32, #tpu.memory_space<vmem>>, vector<3x1xf32>
    %119 = vector.extract_strided_slice %85 {offsets = [0, 0], sizes = [3, 1], strides = [1, 1]} : vector<3x21xf32> to vector<3x1xf32>
    %120 = arith.mulf %119, %117 : vector<3x1xf32>
    %121 = arith.subf %118, %120 : vector<3x1xf32>
    %122 = vector.broadcast %117 : vector<3x1xf32> to vector<3x21xf32>
    %123 = arith.mulf %86, %122 : vector<3x21xf32>
    %124 = vector.broadcast %121 : vector<3x1xf32> to vector<3x21xf32>
    %125 = arith.addf %123, %124 : vector<3x21xf32>
    %c0_30 = arith.constant 0 : index
    %c0_31 = arith.constant 0 : index
    %126 = vector.load %arg11[%c0_30, %c0_31] : memref<3x21xf32, #tpu.memory_space<vmem>>, vector<3x21xf32>
    tpu.vector_store %arg11[%c0_30, %c0_31], %125 {strides = array<i32>} : memref<3x21xf32, #tpu.memory_space<vmem>>, vector<3x21xf32>,
    %127 = vector.extract_strided_slice %116 {offsets = [0, 0], sizes = [3, 778], strides = [1, 1]} : vector<12x778xf32> to vector<3x778xf32>
    %128 = vector.extract_strided_slice %56 {offsets = [0, 0], sizes = [1, 778], strides = [1, 1]} : vector<3x778xf32> to vector<1x778xf32>
    %129 = vector.broadcast %128 : vector<1x778xf32> to vector<3x778xf32>
    %130 = arith.mulf %127, %129 : vector<3x778xf32>
    %131 = vector.extract_strided_slice %116 {offsets = [3, 0], sizes = [3, 778], strides = [1, 1]} : vector<12x778xf32> to vector<3x778xf32>
    %132 = vector.extract_strided_slice %56 {offsets = [1, 0], sizes = [1, 778], strides = [1, 1]} : vector<3x778xf32> to vector<1x778xf32>
    %133 = vector.broadcast %132 : vector<1x778xf32> to vector<3x778xf32>
    %134 = arith.mulf %131, %133 : vector<3x778xf32>
    %135 = arith.addf %130, %134 : vector<3x778xf32>
    %136 = vector.extract_strided_slice %116 {offsets = [6, 0], sizes = [3, 778], strides = [1, 1]} : vector<12x778xf32> to vector<3x778xf32>
    %137 = vector.extract_strided_slice %56 {offsets = [2, 0], sizes = [1, 778], strides = [1, 1]} : vector<3x778xf32> to vector<1x778xf32>
    %138 = vector.broadcast %137 : vector<1x778xf32> to vector<3x778xf32>
    %139 = arith.mulf %136, %138 : vector<3x778xf32>
    %140 = arith.addf %135, %139 : vector<3x778xf32>
    %141 = vector.extract_strided_slice %116 {offsets = [9, 0], sizes = [3, 778], strides = [1, 1]} : vector<12x778xf32> to vector<3x778xf32>
    %142 = arith.addf %140, %141 : vector<3x778xf32>
    %143 = vector.broadcast %121 : vector<3x1xf32> to vector<3x778xf32>
    %144 = arith.addf %142, %143 : vector<3x778xf32>
    %c0_32 = arith.constant 0 : index
    %c0_33 = arith.constant 0 : index
    %145 = vector.load %arg12[%c0_32, %c0_33] : memref<3x778xf32, #tpu.memory_space<vmem>>, vector<3x778xf32>
    tpu.vector_store %arg12[%c0_32, %c0_33], %144 {strides = array<i32>} : memref<3x778xf32, #tpu.memory_space<vmem>>, vector<3x778xf32>,
    return
  }
}

</mosaic_0001>

<llo_original>
// kernel: tpu_custom_call.1
$region0: #{tpu_custom_call.1}
  #allocation0 [shape = 'u32[]', space=smem, size = 0x4, offset = 0x4, fixed_abs, tag = 'smem constant byte address 0x4 - core index']
  #allocation1 [shape = 'u32[144,128]{1,0:T(1,128)}', space=vmem, size = 0x12000, scoped, tag = 'internal scratch']
  %s0 = inlined_call_operand.hbm [shape: f32[3,21], index: 0, kind: input, shape index: {}]
  %s1 = inlined_call_operand.hbm [shape: f32[3,30], index: 1, kind: input, shape index: {}]
  %s2 = inlined_call_operand.hbm [shape: f32[3,778], index: 2, kind: input, shape index: {}]
  %s3 = inlined_call_operand.hbm [shape: f32[30,778], index: 3, kind: input, shape index: {}]
  %s4 = inlined_call_operand.hbm [shape: f32[3,149], index: 4, kind: input, shape index: {}]
  %s5 = inlined_call_operand.hbm [shape: f32[30,149], index: 5, kind: input, shape index: {}]
  %s6 = inlined_call_operand.vmem [shape: f32[21,149], index: 6, kind: input, shape index: {}]
  %s7 = inlined_call_operand.hbm [shape: f32[21,778], index: 7, kind: input, shape index: {}]
  %s8 = inlined_call_operand.vmem [shape: f32[12,1], index: 8, kind: input, shape index: {}]
  %s9 = inlined_call_operand.vmem [shape: f32[3,1], index: 9, kind: input, shape index: {}]
  %s10 = inlined_call_operand.vmem [shape: f32[3,1], index: 10, kind: input, shape index: {}]
  %s11 = inlined_call_operand.hbm [shape: f32[3,21], index: 11, kind: output, shape index: {0}]
  %s12 = inlined_call_operand.hbm [shape: f32[3,778], index: 12, kind: output, shape index: {1}]
  %13 = xla_tuple %s11, %s12
  %s14 = sld [smem:[#allocation0]]
  $region90: #{tpu_custom_call.1} parent=0
    _
  %s16 = ssub.s32 1, %s14
  %s17 = scalar_select 0, %s16, %s14
  $region1: #{tpu_custom_call.1} parent=0
    #allocation2 [shape = 'u8[2048]{0}', space=vmem, size = 0x800, scoped, tag = 'input window, operand 0, single buffered']
    #allocation3 [shape = 's32[1]{0}', space=sflag, size = 0x4, scoped, tag = 'scoped memory for tpu_custom_call.1']
    #allocation4 [shape = 's32[1]{0}', space=sflag, size = 0x4, scoped, tag = 'scoped memory for tpu_custom_call.1']
    #allocation5 [shape = 'u8[2048]{0}', space=vmem, size = 0x800, scoped, tag = 'input window, operand 1, single buffered']
    #allocation6 [shape = 's32[1]{0}', space=sflag, size = 0x4, scoped, tag = 'scoped memory for tpu_custom_call.1']
    #allocation7 [shape = 'u8[14336]{0}', space=vmem, size = 0x3800, scoped, tag = 'input window, operand 2, single buffered']
    #allocation8 [shape = 'u8[114688]{0}', space=vmem, size = 0x1c000, scoped, tag = 'input window, operand 3, single buffered']
    #allocation9 [shape = 's32[1]{0}', space=sflag, size = 0x4, scoped, tag = 'scoped memory for tpu_custom_call.1']
    #allocation10 [shape = 'u8[4096]{0}', space=vmem, size = 0x1000, scoped, tag = 'input window, operand 4, single buffered']
    #allocation11 [shape = 'u8[32768]{0}', space=vmem, size = 0x8000, scoped, tag = 'input window, operand 5, single buffered']
    #allocation12 [shape = 's32[1]{0}', space=sflag, size = 0x4, scoped, tag = 'scoped memory for tpu_custom_call.1']
    #allocation13 [shape = 'u8[86016]{0}', space=vmem, size = 0x15000, scoped, tag = 'input window, operand 7, single buffered']
    #allocation14 [shape = 'u8[2048]{0}', space=vmem, size = 0x800, scoped, tag = 'output window, operand 0, single buffered']
    #allocation15 [shape = 'u8[14336]{0}', space=vmem, size = 0x3800, scoped, tag = 'output window, operand 1, single buffered']
    #allocation16 [shape = 's32[1]{0}', space=sflag, size = 0x4, scoped, tag = 'scoped memory for tpu_custom_call.1']
    %18 = vsyncpa [#allocation3], 0
    %19 = vsyncpa [#allocation6], 0
    %20 = vsyncpa [#allocation9], 0
    %21 = vsyncpa [#allocation12], 0
    %22 = vsyncpa [#allocation4], 0
    %23 = vsyncpa [#allocation16], 0
    // Predicated region
    $region2: #{tpu_custom_call.1} parent=1 // pred_check
      _
    $region3: #{tpu_custom_call.1} parent=1 // pred_check_branch
      %25 = sbr.rel (0) target = $region5
    $region4: #{tpu_custom_call.1} parent=1 // pred_region
      %s27 = ssub.s32 64, 64
      %28 = vsyncadd [#allocation3], %s27
      %s30 = sshll.u32 [#allocation2], 4
      %s31 = int_to_ptr.vmem [resolvable:$true] %s30
      %33 = dma.hbm_to_vmem [thread:$0]  %s0, 64, %s31, [#allocation3]
    $region5: #{tpu_custom_call.1} parent=1 // pred_fallthru
      _
    // Predicated region
    $region6: #{tpu_custom_call.1} parent=1 // pred_check
      _
    $region7: #{tpu_custom_call.1} parent=1 // pred_check_branch
      %35 = sbr.rel (0) target = $region9
    $region8: #{tpu_custom_call.1} parent=1 // pred_region
      %s37 = ssub.s32 64, 64
      %38 = vsyncadd [#allocation6], %s37
      %s40 = sshll.u32 [#allocation5], 4
      %s41 = int_to_ptr.vmem [resolvable:$true] %s40
      %43 = dma.hbm_to_vmem [thread:$0]  %s1, 64, %s41, [#allocation6]
    $region9: #{tpu_custom_call.1} parent=1 // pred_fallthru
      _
    // Predicated region
    $region10: #{tpu_custom_call.1} parent=1 // pred_check
      _
    $region11: #{tpu_custom_call.1} parent=1 // pred_check_branch
      %45 = sbr.rel (0) target = $region13
    $region12: #{tpu_custom_call.1} parent=1 // pred_region
      %s47 = ssub.s32 448, 448
      %48 = vsyncadd [#allocation6], %s47
      %s50 = sshll.u32 [#allocation7], 4
      %s51 = int_to_ptr.vmem [resolvable:$true] %s50
      %53 = dma.hbm_to_vmem [thread:$0]  %s2, 448, %s51, [#allocation6]
    $region13: #{tpu_custom_call.1} parent=1 // pred_fallthru
      _
    // Predicated region
    $region14: #{tpu_custom_call.1} parent=1 // pred_check
      _
    $region15: #{tpu_custom_call.1} parent=1 // pred_check_branch
      %55 = sbr.rel (0) target = $region17
    $region16: #{tpu_custom_call.1} parent=1 // pred_region
      %s57 = ssub.s32 3584, 3584
      %58 = vsyncadd [#allocation9], %s57
      %s59 = sshll.u32 [#allocation8], 4
      %s60 = int_to_ptr.vmem [resolvable:$true] %s59
      %65 = dma.hbm_to_vmem [thread:$0]  %s3, 3584, %s60, [#allocation9], 896, 896, 56
    $region17: #{tpu_custom_call.1} parent=1 // pred_fallthru
      _
    // Predicated region
    $region18: #{tpu_custom_call.1} parent=1 // pred_check
      _
    $region19: #{tpu_custom_call.1} parent=1 // pred_check_branch
      %67 = sbr.rel (0) target = $region21
    $region20: #{tpu_custom_call.1} parent=1 // pred_region
      %s69 = ssub.s32 128, 128
      %70 = vsyncadd [#allocation9], %s69
      %s72 = sshll.u32 [#allocation10], 4
      %s73 = int_to_ptr.vmem [resolvable:$true] %s72
      %75 = dma.hbm_to_vmem [thread:$0]  %s4, 128, %s73, [#allocation9]
    $region21: #{tpu_custom_call.1} parent=1 // pred_fallthru
      _
    // Predicated region
    $region22: #{tpu_custom_call.1} parent=1 // pred_check
      _
    $region23: #{tpu_custom_call.1} parent=1 // pred_check_branch
      %77 = sbr.rel (0) target = $region25
    $region24: #{tpu_custom_call.1} parent=1 // pred_region
      %s79 = ssub.s32 1024, 1024
      %80 = vsyncadd [#allocation12], %s79
      %s81 = sshll.u32 [#allocation11], 4
      %s82 = int_to_ptr.vmem [resolvable:$true] %s81
      %87 = dma.hbm_to_vmem [thread:$0]  %s5, 1024, %s82, [#allocation12], 256, 256, 16
    $region25: #{tpu_custom_call.1} parent=1 // pred_fallthru
      _
    // Predicated region
    $region26: #{tpu_custom_call.1} parent=1 // pred_check
      _
    $region27: #{tpu_custom_call.1} parent=1 // pred_check_branch
      %89 = sbr.rel (0) target = $region29
    $region28: #{tpu_custom_call.1} parent=1 // pred_region
      _
    $region29: #{tpu_custom_call.1} parent=1 // pred_fallthru
      _
    // Predicated region
    $region30: #{tpu_custom_call.1} parent=1 // pred_check
      _
    $region31: #{tpu_custom_call.1} parent=1 // pred_check_branch
      %91 = sbr.rel (0) target = $region33
    $region32: #{tpu_custom_call.1} parent=1 // pred_region
      %s93 = ssub.s32 2688, 2688
      %94 = vsyncadd [#allocation12], %s93
      %s95 = sshll.u32 [#allocation13], 4
      %s96 = int_to_ptr.vmem [resolvable:$true] %s95
      %101 = dma.hbm_to_vmem [thread:$0]  %s7, 2688, %s96, [#allocation12], 896, 896, 56
    $region33: #{tpu_custom_call.1} parent=1 // pred_fallthru
      _
    // Predicated region
    $region34: #{tpu_custom_call.1} parent=1 // pred_check
      _
    $region35: #{tpu_custom_call.1} parent=1 // pred_check_branch
      %103 = sbr.rel (0) target = $region37
    $region36: #{tpu_custom_call.1} parent=1 // pred_region
      _
    $region37: #{tpu_custom_call.1} parent=1 // pred_fallthru
      _
    // Predicated region
    $region38: #{tpu_custom_call.1} parent=1 // pred_check
      _
    $region39: #{tpu_custom_call.1} parent=1 // pred_check_branch
      %105 = sbr.rel (0) target = $region41
    $region40: #{tpu_custom_call.1} parent=1 // pred_region
      _
    $region41: #{tpu_custom_call.1} parent=1 // pred_fallthru
      _
    // Predicated region
    $region42: #{tpu_custom_call.1} parent=1 // pred_check
      _
    $region43: #{tpu_custom_call.1} parent=1 // pred_check_branch
      %107 = sbr.rel (0) target = $region45
    $region44: #{tpu_custom_call.1} parent=1 // pred_region
      _
    $region45: #{tpu_custom_call.1} parent=1 // pred_fallthru
      _
    // Predicated region
    $region46: #{tpu_custom_call.1} parent=1 // pred_check
      _
    $region47: #{tpu_custom_call.1} parent=1 // pred_check_branch
      %109 = sbr.rel (0) target = $region49
    $region48: #{tpu_custom_call.1} parent=1 // pred_region
      %110 = dma.done [#allocation3], 64
    $region49: #{tpu_custom_call.1} parent=1 // pred_fallthru
      _
    // Predicated region
    $region50: #{tpu_custom_call.1} parent=1 // pred_check
      _
    $region51: #{tpu_custom_call.1} parent=1 // pred_check_branch
      %112 = sbr.rel (0) target = $region53
    $region52: #{tpu_custom_call.1} parent=1 // pred_region
      %113 = dma.done [#allocation6], 64
    $region53: #{tpu_custom_call.1} parent=1 // pred_fallthru
      _
    // Predicated region
    $region54: #{tpu_custom_call.1} parent=1 // pred_check
      _
    $region55: #{tpu_custom_call.1} parent=1 // pred_check_branch
      %115 = sbr.rel (0) target = $region57
    $region56: #{tpu_custom_call.1} parent=1 // pred_region
      %116 = dma.done [#allocation6], 448
    $region57: #{tpu_custom_call.1} parent=1 // pred_fallthru
      _
    // Predicated region
    $region58: #{tpu_custom_call.1} parent=1 // pred_check
      _
    $region59: #{tpu_custom_call.1} parent=1 // pred_check_branch
      %118 = sbr.rel (0) target = $region61
    $region60: #{tpu_custom_call.1} parent=1 // pred_region
      %119 = dma.done [#allocation9], 3584
    $region61: #{tpu_custom_call.1} parent=1 // pred_fallthru
      _
    // Predicated region
    $region62: #{tpu_custom_call.1} parent=1 // pred_check
      _
    $region63: #{tpu_custom_call.1} parent=1 // pred_check_branch
      %121 = sbr.rel (0) target = $region65
    $region64: #{tpu_custom_call.1} parent=1 // pred_region
      %122 = dma.done [#allocation9], 128
    $region65: #{tpu_custom_call.1} parent=1 // pred_fallthru
      _
    // Predicated region
    $region66: #{tpu_custom_call.1} parent=1 // pred_check
      _
    $region67: #{tpu_custom_call.1} parent=1 // pred_check_branch
      %124 = sbr.rel (0) target = $region69
    $region68: #{tpu_custom_call.1} parent=1 // pred_region
      %125 = dma.done [#allocation12], 1024
    $region69: #{tpu_custom_call.1} parent=1 // pred_fallthru
      _
    // Predicated region
    $region70: #{tpu_custom_call.1} parent=1 // pred_check
      _
    $region71: #{tpu_custom_call.1} parent=1 // pred_check_branch
      %127 = sbr.rel (0) target = $region73
    $region72: #{tpu_custom_call.1} parent=1 // pred_region
      %128 = dma.done [#allocation12], 2688
    $region73: #{tpu_custom_call.1} parent=1 // pred_fallthru
      _
    %v129 = vld [vmem:[#allocation2] sm:$0x1]
    %v130 = vld [vmem:[#allocation2 + $0x1] sm:$0x1]
    %v131 = vld [vmem:[#allocation2 + $0x2] sm:$0x1]
    %v132 = vmul.f32 %v129, %v129
    %v133 = vmul.f32 %v130, %v130
    %v134 = vadd.f32 %v132, %v133
    %v135 = vmul.f32 %v131, %v131
    %v136 = vadd.f32 %v134, %v135
    %v137 = vmax.f32 %v136, 1e-16
    %v138 = vrsqrt.pop %v137
    %v139 = vmul.f32 %v136, %v138
    %v140 = vand.u32 2147483647, %v139
    %vm141 = vcmp.le.f32.partialorder %v140, 0.7853982
    %vm142 = vcmp.lt.s32.totalorder %v139, 0
    %v143 = vand.u32 %v139, 2139095040
    %v144 = vshrl.u32 %v143, 23
    %v145 = vsub.s32 %v144, 127
    %v146 = vand.u32 2147483647, %v139
    %v147 = vand.u32 %v146, 8388607
    %v148 = vor.u32 %v147, 8388608
    %v149 = vsub.s32 0, %v148
    %v150 = vadd.s32 %v145, 1
    %vm151 = vcmp.gt.s32.totalorder %v150, 0
    %v152 = vsel %vm151, %v150, 0
    %v153 = vshrl.u32 %v152, 5
    %v154 = vand.u32 %v152, 31
    %v155 = vsub.s32 32, %v154
    %v156 = vshrl.u32 683565275, %v155
    %v157 = vshll.u32 683565275, %v154
    %v158 = vshrl.u32 2475754826, %v155
    %v159 = vor.u32 %v157, %v158
    %v160 = vshll.u32 2475754826, %v154
    %v161 = vshrl.u32 2131351028, %v155
    %v162 = vor.u32 %v160, %v161
    %v163 = vshll.u32 2131351028, %v154
    %v164 = vshrl.u32 2102212464, %v155
    %v165 = vor.u32 %v163, %v164
    %v166 = vshll.u32 2102212464, %v154
    %v167 = vshrl.u32 920167782, %v155
    %v168 = vor.u32 %v166, %v167
    %v169 = vshll.u32 920167782, %v154
    %v170 = vshrl.u32 1326507024, %v155
    %v171 = vor.u32 %v169, %v170
    %vm172 = vcmp.lt.s32.totalorder %v153, 1
    %vm173 = vcmp.lt.s32.totalorder %v153, 2
    %vm174 = vcmp.lt.s32.totalorder %v153, 3
    %vm175 = vcmp.lt.s32.totalorder %v153, 4
    %v176 = vsel %vm172, %v156, %v159
    %v177 = vsel %vm175, %v165, 2102212464
    %v178 = vsel %vm174, %v162, %v177
    %v179 = vsel %vm173, %v176, %v178
    %v180 = vsel %vm172, %v159, %v162
    %v181 = vsel %vm175, %v168, 920167782
    %v182 = vsel %vm174, %v165, %v181
    %v183 = vsel %vm173, %v180, %v182
    %v184 = vsel %vm172, %v162, %v165
    %v185 = vsel %vm175, %v171, 1326507024
    %v186 = vsel %vm174, %v168, %v185
    %v187 = vsel %vm173, %v184, %v186
    %v188 = vshll.u32 %v148, 8
    %v189 = vmul.u32.u64.compose %v188, %v187
    %v190 = vextract.low.u32 %v189
    %v191 = vextract.high.u32 %v189
    %v192 = vmul.u32.u64.compose %v188, %v183
    %v193 = vextract.low.u32 %v192
    %v194 = vextract.high.u32 %v192
    %v195 = vmul.u32 %v188, %v179
    %v196 = vadd.s32 %v191, %v193
    %vm197 = vc.u32 %v191, %v193
    %v198 = vadd.s32 %v194, 1
    %v199 = vsel %vm197, %v198, %v194
    %v200 = vadd.s32 %v195, %v199
    %v201 = vadd.s32 %v200, 536870912
    %v202 = vshrl.u32 %v201, 30
    %v203 = vshll.u32 %v202, 30
    %v204 = vsub.s32 %v200, %v203
    %vm205 = vcmp.lt.s32.totalorder %v204, 0
    %v206 = vsub.s32 0, %v204
    %v207 = vsel %vm205, %v206, %v204
    %v208 = vclz %v207
    %v209 = vsub.s32 %v208, 2
    %vm210 = vcmp.gt.s32.totalorder 0, %v209
    %v211 = vsel %vm210, 0, %v209
    %v212 = vsub.s32 32, %v211
    %v213 = vshll.u32 %v204, %v211
    %v214 = vshrl.u32 %v196, %v212
    %v215 = vor.u32 %v213, %v214
    %v216 = vsub.s32 4294967266, %v211
    %v217 = vadd.s32 %v216, 127
    %v218 = vshll.u32 %v217, 23
    %v219 = vor.u32 4788187, %v218
    %v220 = vand.u32 2147483647, %v219
    %v222 = vcvt.s32.f32 %v215
    %v223 = vmul.f32 %v222, %v220
    %v224 = vxor.u32 %v223, 2147483648
    %v225 = vsel %vm142, %v224, %v223
    %v226 = vsub.s32 4, %v202
    %v227 = vsel %vm142, %v226, %v202
    %v228 = vsel %vm141, %v139, %v225
    %v229 = vsel %vm141, 0, %v227
    %v230 = vcosq.f32.pop %v228
    %v231 = vsinq.f32.pop %v228
    %vm232 = vweird.f32 %v139
    %v233 = vand.u32 %v229, 3
    %vm234 = vcmp.lt.s32.totalorder %v233, 2
    %vm235 = vcmp.eq.s32.totalorder %v233, 0
    %v236 = vxor.u32 %v231, 2147483648
    %v237 = vsel %vm235, %v230, %v236
    %vm238 = vcmp.eq.s32.totalorder %v233, 2
    %v239 = vxor.u32 %v230, 2147483648
    %v240 = vsel %vm238, %v239, %v231
    %v241 = vsel %vm234, %v237, %v240
    %v242 = vsel %vm232, nan, %v241
    %v243 = vand.u32 2147483647, %v139
    %vm244 = vcmp.le.f32.partialorder %v243, 0.7853982
    %vm245 = vcmp.lt.s32.totalorder %v139, 0
    %v246 = vand.u32 %v139, 2139095040
    %v247 = vshrl.u32 %v246, 23
    %v248 = vsub.s32 %v247, 127
    %v249 = vand.u32 2147483647, %v139
    %v250 = vand.u32 %v249, 8388607
    %v251 = vor.u32 %v250, 8388608
    %v252 = vsub.s32 0, %v251
    %v253 = vadd.s32 %v248, 1
    %vm254 = vcmp.gt.s32.totalorder %v253, 0
    %v255 = vsel %vm254, %v253, 0
    %v256 = vshrl.u32 %v255, 5
    %v257 = vand.u32 %v255, 31
    %v258 = vsub.s32 32, %v257
    %v259 = vshrl.u32 683565275, %v258
    %v260 = vshll.u32 683565275, %v257
    %v261 = vshrl.u32 2475754826, %v258
    %v262 = vor.u32 %v260, %v261
    %v263 = vshll.u32 2475754826, %v257
    %v264 = vshrl.u32 2131351028, %v258
    %v265 = vor.u32 %v263, %v264
    %v266 = vshll.u32 2131351028, %v257
    %v267 = vshrl.u32 2102212464, %v258
    %v268 = vor.u32 %v266, %v267
    %v269 = vshll.u32 2102212464, %v257
    %v270 = vshrl.u32 920167782, %v258
    %v271 = vor.u32 %v269, %v270
    %v272 = vshll.u32 920167782, %v257
    %v273 = vshrl.u32 1326507024, %v258
    %v274 = vor.u32 %v272, %v273
    %vm275 = vcmp.lt.s32.totalorder %v256, 1
    %vm276 = vcmp.lt.s32.totalorder %v256, 2
    %vm277 = vcmp.lt.s32.totalorder %v256, 3
    %vm278 = vcmp.lt.s32.totalorder %v256, 4
    %v279 = vsel %vm275, %v259, %v262
    %v280 = vsel %vm278, %v268, 2102212464
    %v281 = vsel %vm277, %v265, %v280
    %v282 = vsel %vm276, %v279, %v281
    %v283 = vsel %vm275, %v262, %v265
    %v284 = vsel %vm278, %v271, 920167782
    %v285 = vsel %vm277, %v268, %v284
    %v286 = vsel %vm276, %v283, %v285
    %v287 = vsel %vm275, %v265, %v268
    %v288 = vsel %vm278, %v274, 1326507024
    %v289 = vsel %vm277, %v271, %v288
    %v290 = vsel %vm276, %v287, %v289
    %v291 = vshll.u32 %v251, 8
    %v292 = vmul.u32.u64.compose %v291, %v290
    %v293 = vextract.low.u32 %v292
    %v294 = vextract.high.u32 %v292
    %v295 = vmul.u32.u64.compose %v291, %v286
    %v296 = vextract.low.u32 %v295
    %v297 = vextract.high.u32 %v295
    %v298 = vmul.u32 %v291, %v282
    %v299 = vadd.s32 %v294, %v296
    %vm300 = vc.u32 %v294, %v296
    %v301 = vadd.s32 %v297, 1
    %v302 = vsel %vm300, %v301, %v297
    %v303 = vadd.s32 %v298, %v302
    %v304 = vadd.s32 %v303, 536870912
    %v305 = vshrl.u32 %v304, 30
    %v306 = vshll.u32 %v305, 30
    %v307 = vsub.s32 %v303, %v306
    %vm308 = vcmp.lt.s32.totalorder %v307, 0
    %v309 = vsub.s32 0, %v307
    %v310 = vsel %vm308, %v309, %v307
    %v311 = vclz %v310
    %v312 = vsub.s32 %v311, 2
    %vm313 = vcmp.gt.s32.totalorder 0, %v312
    %v314 = vsel %vm313, 0, %v312
    %v315 = vsub.s32 32, %v314
    %v316 = vshll.u32 %v307, %v314
    %v317 = vshrl.u32 %v299, %v315
    %v318 = vor.u32 %v316, %v317
    %v319 = vsub.s32 4294967266, %v314
    %v320 = vadd.s32 %v319, 127
    %v321 = vshll.u32 %v320, 23
    %v322 = vor.u32 4788187, %v321
    %v323 = vand.u32 2147483647, %v322
    %v325 = vcvt.s32.f32 %v318
    %v326 = vmul.f32 %v325, %v323
    %v327 = vxor.u32 %v326, 2147483648
    %v328 = vsel %vm245, %v327, %v326
    %v329 = vsub.s32 4, %v305
    %v330 = vsel %vm245, %v329, %v305
    %v331 = vsel %vm244, %v139, %v328
    %v332 = vsel %vm244, 0, %v330
    %v333 = vcosq.f32.pop %v331
    %v334 = vsinq.f32.pop %v331
    %vm335 = vweird.f32 %v139
    %v336 = vadd.s32 %v332, 3
    %v337 = vand.u32 %v336, 3
    %vm338 = vcmp.lt.s32.totalorder %v337, 2
    %vm339 = vcmp.eq.s32.totalorder %v337, 0
    %v340 = vxor.u32 %v334, 2147483648
    %v341 = vsel %vm339, %v333, %v340
    %vm342 = vcmp.eq.s32.totalorder %v337, 2
    %v343 = vxor.u32 %v333, 2147483648
    %v344 = vsel %vm342, %v343, %v334
    %v345 = vsel %vm338, %v341, %v344
    %v346 = vsel %vm335, nan, %v345
    %v347 = vsub.f32 1.0, %v242
    %v348 = vmul.f32 %v129, %v138
    %v349 = vmul.f32 %v130, %v138
    %v350 = vmul.f32 %v131, %v138
    %v351 = vmul.f32 %v347, %v348
    %v352 = vmul.f32 %v351, %v348
    %v353 = vadd.f32 %v352, %v242
    %v354 = vmul.f32 %v351, %v349
    %v355 = vmul.f32 %v350, %v346
    %v356 = vsub.f32 %v354, %v355
    %v357 = vmul.f32 %v351, %v350
    %v358 = vmul.f32 %v349, %v346
    %v359 = vadd.f32 %v357, %v358
    %v360 = vadd.f32 %v354, %v355
    %v361 = vmul.f32 %v347, %v349
    %v362 = vmul.f32 %v361, %v349
    %v363 = vadd.f32 %v362, %v242
    %v364 = vmul.f32 %v361, %v350
    %v365 = vmul.f32 %v348, %v346
    %v366 = vsub.f32 %v364, %v365
    %v367 = vsub.f32 %v357, %v358
    %v368 = vadd.f32 %v364, %v365
    %v369 = vmul.f32 %v347, %v350
    %v370 = vmul.f32 %v369, %v350
    %v371 = vadd.f32 %v370, %v242
    %v372 = vld [vmem:[#allocation7] sm:$0x77]
    %v373 = vld [vmem:[#allocation7 + $0x8] sm:$0x77]
    %v374 = vld [vmem:[#allocation7 + $0x10] sm:$0x77]
    %v375 = vld [vmem:[#allocation7 + $0x18] sm:$0x7]
    %v376 = vld [vmem:[#allocation5] sm:$0x7]
    %v377 = vld [vmem:[#allocation8] sm:$0xff]
    %v378 = vld [vmem:[#allocation8 + $0x8] sm:$0xff]
    %v379 = vld [vmem:[#allocation8 + $0x10] sm:$0xff]
    %v380 = vld [vmem:[#allocation8 + $0x18] sm:$0xff]
    %v381 = vld [vmem:[#allocation8 + $0x20] sm:$0xff]
    %v382 = vld [vmem:[#allocation8 + $0x28] sm:$0xff]
    %v383 = vld [vmem:[#allocation8 + $0x30] sm:$0xff]
    %v384 = vld [vmem:[#allocation8 + $0x38] sm:$0xff]
    %v385 = vld [vmem:[#allocation8 + $0x40] sm:$0xff]
    %v386 = vld [vmem:[#allocation8 + $0x48] sm:$0xff]
    %v387 = vld [vmem:[#allocation8 + $0x50] sm:$0xff]
    %v388 = vld [vmem:[#allocation8 + $0x58] sm:$0xff]
    %v389 = vld [vmem:[#allocation8 + $0x60] sm:$0xff]
    %v390 = vld [vmem:[#allocation8 + $0x68] sm:$0xff]
    %v391 = vld [vmem:[#allocation8 + $0x70] sm:$0xff]
    %v392 = vld [vmem:[#allocation8 + $0x78] sm:$0xff]
    %v393 = vld [vmem:[#allocation8 + $0x80] sm:$0xff]
    %v394 = vld [vmem:[#allocation8 + $0x88] sm:$0xff]
    %v395 = vld [vmem:[#allocation8 + $0x90] sm:$0xff]
    %v396 = vld [vmem:[#allocation8 + $0x98] sm:$0xff]
    %v397 = vld [vmem:[#allocation8 + $0xa0] sm:$0xff]
    %v398 = vld [vmem:[#allocation8 + $0xa8] sm:$0x3f]
    %v399 = vld [vmem:[#allocation8 + $0xb0] sm:$0x3f]
    %v400 = vld [vmem:[#allocation8 + $0xb8] sm:$0x3f]
    %v401 = vld [vmem:[#allocation8 + $0xc0] sm:$0x3f]
    %v402 = vld [vmem:[#allocation8 + $0xc8] sm:$0x3f]
    %v403 = vld [vmem:[#allocation8 + $0xd0] sm:$0x3f]
    %v404 = vld [vmem:[#allocation8 + $0xd8] sm:$0x3f]
    %vm405 = vcmask 244736
    %v407 = vsel %vm405, %v376, 0
    %vm409 = vcmask 1045504
    %v411 = vsel %vm409, %v398, 0
    %v414 = vsel %vm409, %v399, 0
    %v417 = vsel %vm409, %v400, 0
    %v420 = vsel %vm409, %v401, 0
    %v423 = vsel %vm409, %v402, 0
    %v426 = vsel %vm409, %v403, 0
    %v429 = vsel %vm409, %v404, 0
    %431 = vmatprep.subr.mxu0 %v378
    %432 = vmatpush1.msra.mxu0 %v377
    %433 = vmatprep.subr.mxu0 %v385
    %434 = vmatpush1.msra.mxu0 %v384
    %435 = vmatprep.subr.mxu0 %v392
    %436 = vmatpush1.msra.mxu0 %v391
    %437 = vmatprep.subr.mxu0 %v414
    %438 = vmatpush1.msra.mxu0 %v411
    %439 = vmatprep.subr.mxu0 0.0
    %440 = vmatpush1.msra.mxu0 0.0
    %441 = vmatprep.subr.mxu0 0.0
    %442 = vmatpush1.msra.mxu0 0.0
    %443 = vmatprep.subr.mxu0 0.0
    %444 = vmatpush1.msra.mxu0 0.0
    %445 = vmatprep.subr.mxu0 0.0
    %446 = vmatpush1.msra.mxu0 0.0
    %447 = vmatprep.subr.mxu0 0.0
    %448 = vmatpush1.msra.mxu0 0.0
    %449 = vmatprep.subr.mxu0 0.0
    %450 = vmatpush1.msra.mxu0 0.0
    %451 = vmatprep.subr.mxu0 0.0
    %452 = vmatpush1.msra.mxu0 0.0
    %453 = vmatprep.subr.mxu0 0.0
    %454 = vmatpush1.msra.mxu0 0.0
    %455 = vmatprep.subr.mxu0 0.0
    %456 = vmatpush1.msra.mxu0 0.0
    %457 = vmatprep.subr.mxu0 0.0
    %458 = vmatpush1.msra.mxu0 0.0
    %459 = vmatprep.subr.mxu0 0.0
    %460 = vmatpush1.msra.mxu0 0.0
    %461 = vmatprep.subr.mxu0 0.0
    %462 = vmatpush1.msra.mxu0 0.0
    %463 = vmatprep.subr.mxu0 0.0
    %464 = vmatpush1.msra.mxu0 0.0
    %465 = vmatprep.subr.mxu0 0.0
    %466 = vmatpush1.msra.mxu0 0.0
    %467 = vmatprep.subr.mxu0 0.0
    %468 = vmatpush1.msra.mxu0 0.0
    %469 = vmatprep.subr.mxu0 0.0
    %470 = vmatpush1.msra.mxu0 0.0
    %471 = vmatprep.subr.mxu0 0.0
    %472 = vmatpush1.msra.mxu0 0.0
    %473 = vmatprep.subr.mxu0 0.0
    %474 = vmatpush1.msra.mxu0 0.0
    %475 = vmatprep.subr.mxu0 0.0
    %476 = vmatpush1.msra.mxu0 0.0
    %477 = vmatprep.subr.mxu0 0.0
    %478 = vmatpush1.msra.mxu0 0.0
    %479 = vmatprep.subr.mxu0 0.0
    %480 = vmatpush1.msra.mxu0 0.0
    %481 = vmatprep.subr.mxu0 0.0
    %482 = vmatpush1.msra.mxu0 0.0
    %483 = vmatprep.subr.mxu0 0.0
    %484 = vmatpush1.msra.mxu0 0.0
    %485 = vmatprep.subr.mxu0 0.0
    %486 = vmatpush1.msra.mxu0 0.0
    %487 = vmatprep.subr.mxu0 0.0
    %488 = vmatpush1.msra.mxu0 0.0
    %489 = vmatprep.subr.mxu0 0.0
    %490 = vmatpush1.msra.mxu0 0.0
    %491 = vmatprep.subr.mxu0 0.0
    %492 = vmatpush1.msra.mxu0 0.0
    %493 = vmatprep.subr.mxu0 0.0
    %494 = vmatpush1.msra.mxu0 0.0
    %495 = vmatprep.mubr.f32.mxu0 0.0
    %496 = vmatmul.mubr.f32.gmra.mrb[0].mxu0 %v407
    %v497 = vpop.f32.mrb[0].mxu0
    %v498 = vadd.f32 0.0, %v497
    %v499 = vpop.f32.mrb[0].mxu0
    %v500 = vadd.f32 0.0, %v499
    %501 = vdwg.mxu0
    %502 = vmatprep.subr.mxu0 %v380
    %503 = vmatpush1.msra.mxu0 %v379
    %504 = vmatprep.subr.mxu0 %v387
    %505 = vmatpush1.msra.mxu0 %v386
    %506 = vmatprep.subr.mxu0 %v394
    %507 = vmatpush1.msra.mxu0 %v393
    %508 = vmatprep.subr.mxu0 %v420
    %509 = vmatpush1.msra.mxu0 %v417
    %510 = vmatprep.subr.mxu0 0.0
    %511 = vmatpush1.msra.mxu0 0.0
    %512 = vmatprep.subr.mxu0 0.0
    %513 = vmatpush1.msra.mxu0 0.0
    %514 = vmatprep.subr.mxu0 0.0
    %515 = vmatpush1.msra.mxu0 0.0
    %516 = vmatprep.subr.mxu0 0.0
    %517 = vmatpush1.msra.mxu0 0.0
    %518 = vmatprep.subr.mxu0 0.0
    %519 = vmatpush1.msra.mxu0 0.0
    %520 = vmatprep.subr.mxu0 0.0
    %521 = vmatpush1.msra.mxu0 0.0
    %522 = vmatprep.subr.mxu0 0.0
    %523 = vmatpush1.msra.mxu0 0.0
    %524 = vmatprep.subr.mxu0 0.0
    %525 = vmatpush1.msra.mxu0 0.0
    %526 = vmatprep.subr.mxu0 0.0
    %527 = vmatpush1.msra.mxu0 0.0
    %528 = vmatprep.subr.mxu0 0.0
    %529 = vmatpush1.msra.mxu0 0.0
    %530 = vmatprep.subr.mxu0 0.0
    %531 = vmatpush1.msra.mxu0 0.0
    %532 = vmatprep.subr.mxu0 0.0
    %533 = vmatpush1.msra.mxu0 0.0
    %534 = vmatprep.subr.mxu0 0.0
    %535 = vmatpush1.msra.mxu0 0.0
    %536 = vmatprep.subr.mxu0 0.0
    %537 = vmatpush1.msra.mxu0 0.0
    %538 = vmatprep.subr.mxu0 0.0
    %539 = vmatpush1.msra.mxu0 0.0
    %540 = vmatprep.subr.mxu0 0.0
    %541 = vmatpush1.msra.mxu0 0.0
    %542 = vmatprep.subr.mxu0 0.0
    %543 = vmatpush1.msra.mxu0 0.0
    %544 = vmatprep.subr.mxu0 0.0
    %545 = vmatpush1.msra.mxu0 0.0
    %546 = vmatprep.subr.mxu0 0.0
    %547 = vmatpush1.msra.mxu0 0.0
    %548 = vmatprep.subr.mxu0 0.0
    %549 = vmatpush1.msra.mxu0 0.0
    %550 = vmatprep.subr.mxu0 0.0
    %551 = vmatpush1.msra.mxu0 0.0
    %552 = vmatprep.subr.mxu0 0.0
    %553 = vmatpush1.msra.mxu0 0.0
    %554 = vmatprep.subr.mxu0 0.0
    %555 = vmatpush1.msra.mxu0 0.0
    %556 = vmatprep.subr.mxu0 0.0
    %557 = vmatpush1.msra.mxu0 0.0
    %558 = vmatprep.subr.mxu0 0.0
    %559 = vmatpush1.msra.mxu0 0.0
    %560 = vmatprep.subr.mxu0 0.0
    %561 = vmatpush1.msra.mxu0 0.0
    %562 = vmatprep.subr.mxu0 0.0
    %563 = vmatpush1.msra.mxu0 0.0
    %564 = vmatprep.subr.mxu0 0.0
    %565 = vmatpush1.msra.mxu0 0.0
    %566 = vmatprep.mubr.f32.mxu0 0.0
    %567 = vmatmul.mubr.f32.gmra.mrb[0].mxu0 %v407
    %v568 = vpop.f32.mrb[0].mxu0
    %v569 = vadd.f32 0.0, %v568
    %v570 = vpop.f32.mrb[0].mxu0
    %v571 = vadd.f32 0.0, %v570
    %572 = vdwg.mxu0
    %573 = vmatprep.subr.mxu0 %v382
    %574 = vmatpush1.msra.mxu0 %v381
    %575 = vmatprep.subr.mxu0 %v389
    %576 = vmatpush1.msra.mxu0 %v388
    %577 = vmatprep.subr.mxu0 %v396
    %578 = vmatpush1.msra.mxu0 %v395
    %579 = vmatprep.subr.mxu0 %v426
    %580 = vmatpush1.msra.mxu0 %v423
    %581 = vmatprep.subr.mxu0 0.0
    %582 = vmatpush1.msra.mxu0 0.0
    %583 = vmatprep.subr.mxu0 0.0
    %584 = vmatpush1.msra.mxu0 0.0
    %585 = vmatprep.subr.mxu0 0.0
    %586 = vmatpush1.msra.mxu0 0.0
    %587 = vmatprep.subr.mxu0 0.0
    %588 = vmatpush1.msra.mxu0 0.0
    %589 = vmatprep.subr.mxu0 0.0
    %590 = vmatpush1.msra.mxu0 0.0
    %591 = vmatprep.subr.mxu0 0.0
    %592 = vmatpush1.msra.mxu0 0.0
    %593 = vmatprep.subr.mxu0 0.0
    %594 = vmatpush1.msra.mxu0 0.0
    %595 = vmatprep.subr.mxu0 0.0
    %596 = vmatpush1.msra.mxu0 0.0
    %597 = vmatprep.subr.mxu0 0.0
    %598 = vmatpush1.msra.mxu0 0.0
    %599 = vmatprep.subr.mxu0 0.0
    %600 = vmatpush1.msra.mxu0 0.0
    %601 = vmatprep.subr.mxu0 0.0
    %602 = vmatpush1.msra.mxu0 0.0
    %603 = vmatprep.subr.mxu0 0.0
    %604 = vmatpush1.msra.mxu0 0.0
    %605 = vmatprep.subr.mxu0 0.0
    %606 = vmatpush1.msra.mxu0 0.0
    %607 = vmatprep.subr.mxu0 0.0
    %608 = vmatpush1.msra.mxu0 0.0
    %609 = vmatprep.subr.mxu0 0.0
    %610 = vmatpush1.msra.mxu0 0.0
    %611 = vmatprep.subr.mxu0 0.0
    %612 = vmatpush1.msra.mxu0 0.0
    %613 = vmatprep.subr.mxu0 0.0
    %614 = vmatpush1.msra.mxu0 0.0
    %615 = vmatprep.subr.mxu0 0.0
    %616 = vmatpush1.msra.mxu0 0.0
    %617 = vmatprep.subr.mxu0 0.0
    %618 = vmatpush1.msra.mxu0 0.0
    %619 = vmatprep.subr.mxu0 0.0
    %620 = vmatpush1.msra.mxu0 0.0
    %621 = vmatprep.subr.mxu0 0.0
    %622 = vmatpush1.msra.mxu0 0.0
    %623 = vmatprep.subr.mxu0 0.0
    %624 = vmatpush1.msra.mxu0 0.0
    %625 = vmatprep.subr.mxu0 0.0
    %626 = vmatpush1.msra.mxu0 0.0
    %627 = vmatprep.subr.mxu0 0.0
    %628 = vmatpush1.msra.mxu0 0.0
    %629 = vmatprep.subr.mxu0 0.0
    %630 = vmatpush1.msra.mxu0 0.0
    %631 = vmatprep.subr.mxu0 0.0
    %632 = vmatpush1.msra.mxu0 0.0
    %633 = vmatprep.subr.mxu0 0.0
    %634 = vmatpush1.msra.mxu0 0.0
    %635 = vmatprep.subr.mxu0 0.0
    %636 = vmatpush1.msra.mxu0 0.0
    %637 = vmatprep.mubr.f32.mxu0 0.0
    %638 = vmatmul.mubr.f32.gmra.mrb[0].mxu0 %v407
    %v639 = vpop.f32.mrb[0].mxu0
    %v640 = vadd.f32 0.0, %v639
    %v641 = vpop.f32.mrb[0].mxu0
    %v642 = vadd.f32 0.0, %v641
    %643 = vdwg.mxu0
    %644 = vmatprep.subr.mxu0 0.0
    %645 = vmatpush1.msra.mxu0 %v383
    %646 = vmatprep.subr.mxu0 0.0
    %647 = vmatpush1.msra.mxu0 %v390
    %648 = vmatprep.subr.mxu0 0.0
    %649 = vmatpush1.msra.mxu0 %v397
    %650 = vmatprep.subr.mxu0 0.0
    %651 = vmatpush1.msra.mxu0 %v429
    %652 = vmatprep.subr.mxu0 0.0
    %653 = vmatpush1.msra.mxu0 0.0
    %654 = vmatprep.subr.mxu0 0.0
    %655 = vmatpush1.msra.mxu0 0.0
    %656 = vmatprep.subr.mxu0 0.0
    %657 = vmatpush1.msra.mxu0 0.0
    %658 = vmatprep.subr.mxu0 0.0
    %659 = vmatpush1.msra.mxu0 0.0
    %660 = vmatprep.subr.mxu0 0.0
    %661 = vmatpush1.msra.mxu0 0.0
    %662 = vmatprep.subr.mxu0 0.0
    %663 = vmatpush1.msra.mxu0 0.0
    %664 = vmatprep.subr.mxu0 0.0
    %665 = vmatpush1.msra.mxu0 0.0
    %666 = vmatprep.subr.mxu0 0.0
    %667 = vmatpush1.msra.mxu0 0.0
    %668 = vmatprep.subr.mxu0 0.0
    %669 = vmatpush1.msra.mxu0 0.0
    %670 = vmatprep.subr.mxu0 0.0
    %671 = vmatpush1.msra.mxu0 0.0
    %672 = vmatprep.subr.mxu0 0.0
    %673 = vmatpush1.msra.mxu0 0.0
    %674 = vmatprep.subr.mxu0 0.0
    %675 = vmatpush1.msra.mxu0 0.0
    %676 = vmatprep.subr.mxu0 0.0
    %677 = vmatpush1.msra.mxu0 0.0
    %678 = vmatprep.subr.mxu0 0.0
    %679 = vmatpush1.msra.mxu0 0.0
    %680 = vmatprep.subr.mxu0 0.0
    %681 = vmatpush1.msra.mxu0 0.0
    %682 = vmatprep.subr.mxu0 0.0
    %683 = vmatpush1.msra.mxu0 0.0
    %684 = vmatprep.subr.mxu0 0.0
    %685 = vmatpush1.msra.mxu0 0.0
    %686 = vmatprep.subr.mxu0 0.0
    %687 = vmatpush1.msra.mxu0 0.0
    %688 = vmatprep.subr.mxu0 0.0
    %689 = vmatpush1.msra.mxu0 0.0
    %690 = vmatprep.subr.mxu0 0.0
    %691 = vmatpush1.msra.mxu0 0.0
    %692 = vmatprep.subr.mxu0 0.0
    %693 = vmatpush1.msra.mxu0 0.0
    %694 = vmatprep.subr.mxu0 0.0
    %695 = vmatpush1.msra.mxu0 0.0
    %696 = vmatprep.subr.mxu0 0.0
    %697 = vmatpush1.msra.mxu0 0.0
    %698 = vmatprep.subr.mxu0 0.0
    %699 = vmatpush1.msra.mxu0 0.0
    %700 = vmatprep.subr.mxu0 0.0
    %701 = vmatpush1.msra.mxu0 0.0
    %702 = vmatprep.subr.mxu0 0.0
    %703 = vmatpush1.msra.mxu0 0.0
    %704 = vmatprep.subr.mxu0 0.0
    %705 = vmatpush1.msra.mxu0 0.0
    %706 = vmatprep.subr.mxu0 0.0
    %707 = vmatpush1.msra.mxu0 0.0
    %708 = vmatprep.mubr.f32.mxu0 0.0
    %709 = vmatmul.mubr.f32.gmra.mrb[0].mxu0 %v407
    %v710 = vpop.f32.mrb[0].mxu0
    %v711 = vadd.f32 0.0, %v710
    %v712 = vpop.f32.mrb[0].mxu0
    %713 = vdwg.mxu0
    %v720 = vcombine.low %v498, %v500
    %v721 = vcombine.low %v569, %v571
    %v722 = vcombine.low %v640, %v642
    %v726 = vadd.f32 %v372, %v720
    %v727 = vadd.f32 %v373, %v721
    %v728 = vadd.f32 %v374, %v722
    %v729 = vadd.f32 %v375, %v711
    %v730 = vld [vmem:[#allocation10] sm:$0x77]
    %v731 = vld [vmem:[#allocation11] sm:$0xff]
    %v732 = vld [vmem:[#allocation11 + $0x8] sm:$0xff]
    %v733 = vld [vmem:[#allocation11 + $0x10] sm:$0xff]
    %v734 = vld [vmem:[#allocation11 + $0x18] sm:$0xff]
    %v735 = vld [vmem:[#allocation11 + $0x20] sm:$0xff]
    %v736 = vld [vmem:[#allocation11 + $0x28] sm:$0xff]
    %v737 = vld [vmem:[#allocation11 + $0x30] sm:$0x3f]
    %v738 = vld [vmem:[#allocation11 + $0x38] sm:$0x3f]
    %v740 = vsel %vm409, %v737, 0
    %v743 = vsel %vm409, %v738, 0
    %745 = vmatprep.subr.mxu0 %v732
    %746 = vmatpush1.msra.mxu0 %v731
    %747 = vmatprep.subr.mxu0 %v734
    %748 = vmatpush1.msra.mxu0 %v733
    %749 = vmatprep.subr.mxu0 %v736
    %750 = vmatpush1.msra.mxu0 %v735
    %751 = vmatprep.subr.mxu0 %v743
    %752 = vmatpush1.msra.mxu0 %v740
    %753 = vmatprep.subr.mxu0 0.0
    %754 = vmatpush1.msra.mxu0 0.0
    %755 = vmatprep.subr.mxu0 0.0
    %756 = vmatpush1.msra.mxu0 0.0
    %757 = vmatprep.subr.mxu0 0.0
    %758 = vmatpush1.msra.mxu0 0.0
    %759 = vmatprep.subr.mxu0 0.0
    %760 = vmatpush1.msra.mxu0 0.0
    %761 = vmatprep.subr.mxu0 0.0
    %762 = vmatpush1.msra.mxu0 0.0
    %763 = vmatprep.subr.mxu0 0.0
    %764 = vmatpush1.msra.mxu0 0.0
    %765 = vmatprep.subr.mxu0 0.0
    %766 = vmatpush1.msra.mxu0 0.0
    %767 = vmatprep.subr.mxu0 0.0
    %768 = vmatpush1.msra.mxu0 0.0
    %769 = vmatprep.subr.mxu0 0.0
    %770 = vmatpush1.msra.mxu0 0.0
    %771 = vmatprep.subr.mxu0 0.0
    %772 = vmatpush1.msra.mxu0 0.0
    %773 = vmatprep.subr.mxu0 0.0
    %774 = vmatpush1.msra.mxu0 0.0
    %775 = vmatprep.subr.mxu0 0.0
    %776 = vmatpush1.msra.mxu0 0.0
    %777 = vmatprep.subr.mxu0 0.0
    %778 = vmatpush1.msra.mxu0 0.0
    %779 = vmatprep.subr.mxu0 0.0
    %780 = vmatpush1.msra.mxu0 0.0
    %781 = vmatprep.subr.mxu0 0.0
    %782 = vmatpush1.msra.mxu0 0.0
    %783 = vmatprep.subr.mxu0 0.0
    %784 = vmatpush1.msra.mxu0 0.0
    %785 = vmatprep.subr.mxu0 0.0
    %786 = vmatpush1.msra.mxu0 0.0
    %787 = vmatprep.subr.mxu0 0.0
    %788 = vmatpush1.msra.mxu0 0.0
    %789 = vmatprep.subr.mxu0 0.0
    %790 = vmatpush1.msra.mxu0 0.0
    %791 = vmatprep.subr.mxu0 0.0
    %792 = vmatpush1.msra.mxu0 0.0
    %793 = vmatprep.subr.mxu0 0.0
    %794 = vmatpush1.msra.mxu0 0.0
    %795 = vmatprep.subr.mxu0 0.0
    %796 = vmatpush1.msra.mxu0 0.0
    %797 = vmatprep.subr.mxu0 0.0
    %798 = vmatpush1.msra.mxu0 0.0
    %799 = vmatprep.subr.mxu0 0.0
    %800 = vmatpush1.msra.mxu0 0.0
    %801 = vmatprep.subr.mxu0 0.0
    %802 = vmatpush1.msra.mxu0 0.0
    %803 = vmatprep.subr.mxu0 0.0
    %804 = vmatpush1.msra.mxu0 0.0
    %805 = vmatprep.subr.mxu0 0.0
    %806 = vmatpush1.msra.mxu0 0.0
    %807 = vmatprep.subr.mxu0 0.0
    %808 = vmatpush1.msra.mxu0 0.0
    %809 = vmatprep.mubr.f32.mxu0 0.0
    %810 = vmatmul.mubr.f32.gmra.mrb[0].mxu0 %v407
    %v811 = vpop.f32.mrb[0].mxu0
    %v812 = vadd.f32 0.0, %v811
    %v813 = vpop.f32.mrb[0].mxu0
    %v814 = vadd.f32 0.0, %v813
    %815 = vdwg.mxu0
    %v818 = vcombine.low %v812, %v814
    %v820 = vadd.f32 %v730, %v818
    %v822 = vlaneseq
    %v823 = vshrl.u32 %v822, 7
    %v824 = vsub.s32 4, %v823
    %v825 = vrot.slane %v820, %v824
    %v827 = vmul.f32 %v353, %v825
    %v828 = vlaneseq
    %v829 = vshrl.u32 %v828, 7
    %v830 = vsub.s32 5, %v829
    %v831 = vrot.slane %v820, %v830
    %v833 = vmul.f32 %v356, %v831
    %v834 = vadd.f32 %v827, %v833
    %v835 = vlaneseq
    %v836 = vshrl.u32 %v835, 7
    %v837 = vsub.s32 6, %v836
    %v838 = vrot.slane %v820, %v837
    %v840 = vmul.f32 %v359, %v838
    %v841 = vadd.f32 %v834, %v840
    %v842 = vmul.f32 %v360, %v825
    %v843 = vmul.f32 %v363, %v831
    %v844 = vadd.f32 %v842, %v843
    %v845 = vmul.f32 %v366, %v838
    %v846 = vadd.f32 %v844, %v845
    %v847 = vmul.f32 %v367, %v825
    %v848 = vmul.f32 %v368, %v831
    %v849 = vadd.f32 %v847, %v848
    %v850 = vmul.f32 %v371, %v838
    %v851 = vadd.f32 %v849, %v850
    %v853 = vrot.slane %v846, 7
    %v856 = vrot.slane %v851, 6
    %vm858 = vcmask 1040384
    %v859 = vsel %vm858, %v841, %v853
    %vm860 = vcmask 1041408
    %v861 = vsel %vm860, %v859, %v856
    %v862 = vld [vmem:[%s6] sm:$0xff]
    %v863 = vld [vmem:[%s6 + $0x8] sm:$0xff]
    %v864 = vld [vmem:[%s6 + $0x10] sm:$0xff]
    %v865 = vld [vmem:[%s6 + $0x18] sm:$0xff]
    %v866 = vld [vmem:[%s6 + $0x20] sm:$0x1f]
    %v867 = vld [vmem:[%s6 + $0x28] sm:$0x1f]
    %vm868 = vcmask 171008
    %v870 = vsel %vm868, %v861, 0
    %vm872 = vcmask 1044480
    %v874 = vsel %vm872, %v866, 0
    %v877 = vsel %vm872, %v867, 0
    %879 = vmatprep.subr.mxu0 %v863
    %880 = vmatpush1.msra.mxu0 %v862
    %881 = vmatprep.subr.mxu0 %v865
    %882 = vmatpush1.msra.mxu0 %v864
    %883 = vmatprep.subr.mxu0 %v877
    %884 = vmatpush1.msra.mxu0 %v874
    %885 = vmatprep.subr.mxu0 0.0
    %886 = vmatpush1.msra.mxu0 0.0
    %887 = vmatprep.subr.mxu0 0.0
    %888 = vmatpush1.msra.mxu0 0.0
    %889 = vmatprep.subr.mxu0 0.0
    %890 = vmatpush1.msra.mxu0 0.0
    %891 = vmatprep.subr.mxu0 0.0
    %892 = vmatpush1.msra.mxu0 0.0
    %893 = vmatprep.subr.mxu0 0.0
    %894 = vmatpush1.msra.mxu0 0.0
    %895 = vmatprep.subr.mxu0 0.0
    %896 = vmatpush1.msra.mxu0 0.0
    %897 = vmatprep.subr.mxu0 0.0
    %898 = vmatpush1.msra.mxu0 0.0
    %899 = vmatprep.subr.mxu0 0.0
    %900 = vmatpush1.msra.mxu0 0.0
    %901 = vmatprep.subr.mxu0 0.0
    %902 = vmatpush1.msra.mxu0 0.0
    %903 = vmatprep.subr.mxu0 0.0
    %904 = vmatpush1.msra.mxu0 0.0
    %905 = vmatprep.subr.mxu0 0.0
    %906 = vmatpush1.msra.mxu0 0.0
    %907 = vmatprep.subr.mxu0 0.0
    %908 = vmatpush1.msra.mxu0 0.0
    %909 = vmatprep.subr.mxu0 0.0
    %910 = vmatpush1.msra.mxu0 0.0
    %911 = vmatprep.subr.mxu0 0.0
    %912 = vmatpush1.msra.mxu0 0.0
    %913 = vmatprep.subr.mxu0 0.0
    %914 = vmatpush1.msra.mxu0 0.0
    %915 = vmatprep.subr.mxu0 0.0
    %916 = vmatpush1.msra.mxu0 0.0
    %917 = vmatprep.subr.mxu0 0.0
    %918 = vmatpush1.msra.mxu0 0.0
    %919 = vmatprep.subr.mxu0 0.0
    %920 = vmatpush1.msra.mxu0 0.0
    %921 = vmatprep.subr.mxu0 0.0
    %922 = vmatpush1.msra.mxu0 0.0
    %923 = vmatprep.subr.mxu0 0.0
    %924 = vmatpush1.msra.mxu0 0.0
    %925 = vmatprep.subr.mxu0 0.0
    %926 = vmatpush1.msra.mxu0 0.0
    %927 = vmatprep.subr.mxu0 0.0
    %928 = vmatpush1.msra.mxu0 0.0
    %929 = vmatprep.subr.mxu0 0.0
    %930 = vmatpush1.msra.mxu0 0.0
    %931 = vmatprep.subr.mxu0 0.0
    %932 = vmatpush1.msra.mxu0 0.0
    %933 = vmatprep.subr.mxu0 0.0
    %934 = vmatpush1.msra.mxu0 0.0
    %935 = vmatprep.subr.mxu0 0.0
    %936 = vmatpush1.msra.mxu0 0.0
    %937 = vmatprep.subr.mxu0 0.0
    %938 = vmatpush1.msra.mxu0 0.0
    %939 = vmatprep.subr.mxu0 0.0
    %940 = vmatpush1.msra.mxu0 0.0
    %941 = vmatprep.subr.mxu0 0.0
    %942 = vmatpush1.msra.mxu0 0.0
    %943 = vmatprep.mubr.f32.mxu0 0.0
    %944 = vmatmul.mubr.f32.gmra.mrb[0].mxu0 %v870
    %v945 = vpop.f32.mrb[0].mxu0
    %v946 = vadd.f32 0.0, %v945
    %v947 = vpop.f32.mrb[0].mxu0
    %v948 = vadd.f32 0.0, %v947
    %949 = vdwg.mxu0
    %v950 = vmul.f32 %v353, %v820
    %v951 = vlaneseq
    %v952 = vshrl.u32 %v951, 7
    %v953 = vsub.s32 1, %v952
    %v954 = vrot.slane %v820, %v953
    %v956 = vmul.f32 %v356, %v954
    %v957 = vadd.f32 %v950, %v956
    %v958 = vlaneseq
    %v959 = vshrl.u32 %v958, 7
    %v960 = vsub.s32 2, %v959
    %v961 = vrot.slane %v820, %v960
    %v963 = vmul.f32 %v359, %v961
    %v964 = vadd.f32 %v957, %v963
    %v965 = vmul.f32 %v360, %v820
    %v966 = vmul.f32 %v363, %v954
    %v967 = vadd.f32 %v965, %v966
    %v968 = vmul.f32 %v366, %v961
    %v969 = vadd.f32 %v967, %v968
    %v970 = vmul.f32 %v367, %v820
    %v971 = vmul.f32 %v368, %v954
    %v972 = vadd.f32 %v970, %v971
    %v973 = vmul.f32 %v371, %v961
    %v974 = vadd.f32 %v972, %v973
    %v975 = vsub.f32 %v946, %v964
    %v977 = vrot.slane %v969, 7
    %v979 = vsub.f32 %v946, %v977
    %v981 = vrot.slane %v974, 6
    %v983 = vsub.f32 %v946, %v981
    %v985 = vrot.slane %v360, 7
    %v988 = vrot.slane %v367, 6
    %v991 = vrot.slane %v356, 5
    %v994 = vrot.slane %v363, 4
    %v997 = vrot.slane %v368, 3
    %v1000 = vrot.slane %v359, 2
    %v1003 = vrot.slane %v366, 1
    %v1006 = vrot.slane %v975, 7
    %v1009 = vrot.slane %v979, 7
    %v1012 = vrot.slane %v983, 7
    %v1014 = vsel %vm858, %v353, %v985
    %v1015 = vsel %vm860, %v1014, %v988
    %vm1016 = vcmask 1042432
    %v1017 = vsel %vm1016, %v1015, %v991
    %vm1018 = vcmask 1043456
    %v1019 = vsel %vm1018, %v1017, %v994
    %v1020 = vsel %vm872, %v1019, %v997
    %v1021 = vsel %vm409, %v1020, %v1000
    %vm1022 = vcmask 1046528
    %v1023 = vsel %vm1022, %v1021, %v1003
    %v1024 = vsel %vm858, %v371, %v1006
    %v1025 = vsel %vm860, %v1024, %v1009
    %v1026 = vsel %vm1016, %v1025, %v1012
    %v1027 = vld [vmem:[%s8] sm:$0xff]
    %v1028 = vld [vmem:[%s8 + $0x8] sm:$0xf]
    %1030 = vset.pattern.permute.xlu0 0
    %1031 = vperm.xlu0 %1030, %v1027
    %v1032 = vpop.permute.xlu0 %1031
    %1035 = vset.pattern.permute.xlu0 0
    %1036 = vperm.xlu0 %1035, %v1028
    %v1037 = vpop.permute.xlu0 %1036
    %v1039 = vmul.f32 %v1023, %v1032
    %v1040 = vmul.f32 %v1026, %v1037
    %v1041 = vld [vmem:[#allocation13] sm:$0xff]
    %v1042 = vld [vmem:[#allocation13 + $0x8] sm:$0xff]
    %v1043 = vld [vmem:[#allocation13 + $0x10] sm:$0xff]
    %v1044 = vld [vmem:[#allocation13 + $0x18] sm:$0xff]
    %v1045 = vld [vmem:[#allocation13 + $0x20] sm:$0xff]
    %v1046 = vld [vmem:[#allocation13 + $0x28] sm:$0xff]
    %v1047 = vld [vmem:[#allocation13 + $0x30] sm:$0xff]
    %v1048 = vld [vmem:[#allocation13 + $0x38] sm:$0xff]
    %v1049 = vld [vmem:[#allocation13 + $0x40] sm:$0xff]
    %v1050 = vld [vmem:[#allocation13 + $0x48] sm:$0xff]
    %v1051 = vld [vmem:[#allocation13 + $0x50] sm:$0xff]
    %v1052 = vld [vmem:[#allocation13 + $0x58] sm:$0xff]
    %v1053 = vld [vmem:[#allocation13 + $0x60] sm:$0xff]
    %v1054 = vld [vmem:[#allocation13 + $0x68] sm:$0xff]
    %v1055 = vld [vmem:[#allocation13 + $0x70] sm:$0x1f]
    %v1056 = vld [vmem:[#allocation13 + $0x78] sm:$0x1f]
    %v1057 = vld [vmem:[#allocation13 + $0x80] sm:$0x1f]
    %v1058 = vld [vmem:[#allocation13 + $0x88] sm:$0x1f]
    %v1059 = vld [vmem:[#allocation13 + $0x90] sm:$0x1f]
    %v1060 = vld [vmem:[#allocation13 + $0x98] sm:$0x1f]
    %v1061 = vld [vmem:[#allocation13 + $0xa0] sm:$0x1f]
    %v1063 = vsel %vm868, %v1039, 0
    %v1066 = vsel %vm868, %v1040, 0
    %v1069 = vsel %vm872, %v1055, 0
    %v1072 = vsel %vm872, %v1056, 0
    %v1075 = vsel %vm872, %v1057, 0
    %v1078 = vsel %vm872, %v1058, 0
    %v1081 = vsel %vm872, %v1059, 0
    %v1084 = vsel %vm872, %v1060, 0
    %v1087 = vsel %vm872, %v1061, 0
    %1089 = vmatprep.subr.mxu0 %v1042
    %1090 = vmatpush1.msra.mxu0 %v1041
    %1091 = vmatprep.subr.mxu0 %v1049
    %1092 = vmatpush1.msra.mxu0 %v1048
    %1093 = vmatprep.subr.mxu0 %v1072
    %1094 = vmatpush1.msra.mxu0 %v1069
    %1095 = vmatprep.subr.mxu0 0.0
    %1096 = vmatpush1.msra.mxu0 0.0
    %1097 = vmatprep.subr.mxu0 0.0
    %1098 = vmatpush1.msra.mxu0 0.0
    %1099 = vmatprep.subr.mxu0 0.0
    %1100 = vmatpush1.msra.mxu0 0.0
    %1101 = vmatprep.subr.mxu0 0.0
    %1102 = vmatpush1.msra.mxu0 0.0
    %1103 = vmatprep.subr.mxu0 0.0
    %1104 = vmatpush1.msra.mxu0 0.0
    %1105 = vmatprep.subr.mxu0 0.0
    %1106 = vmatpush1.msra.mxu0 0.0
    %1107 = vmatprep.subr.mxu0 0.0
    %1108 = vmatpush1.msra.mxu0 0.0
    %1109 = vmatprep.subr.mxu0 0.0
    %1110 = vmatpush1.msra.mxu0 0.0
    %1111 = vmatprep.subr.mxu0 0.0
    %1112 = vmatpush1.msra.mxu0 0.0
    %1113 = vmatprep.subr.mxu0 0.0
    %1114 = vmatpush1.msra.mxu0 0.0
    %1115 = vmatprep.subr.mxu0 0.0
    %1116 = vmatpush1.msra.mxu0 0.0
    %1117 = vmatprep.subr.mxu0 0.0
    %1118 = vmatpush1.msra.mxu0 0.0
    %1119 = vmatprep.subr.mxu0 0.0
    %1120 = vmatpush1.msra.mxu0 0.0
    %1121 = vmatprep.subr.mxu0 0.0
    %1122 = vmatpush1.msra.mxu0 0.0
    %1123 = vmatprep.subr.mxu0 0.0
    %1124 = vmatpush1.msra.mxu0 0.0
    %1125 = vmatprep.subr.mxu0 0.0
    %1126 = vmatpush1.msra.mxu0 0.0
    %1127 = vmatprep.subr.mxu0 0.0
    %1128 = vmatpush1.msra.mxu0 0.0
    %1129 = vmatprep.subr.mxu0 0.0
    %1130 = vmatpush1.msra.mxu0 0.0
    %1131 = vmatprep.subr.mxu0 0.0
    %1132 = vmatpush1.msra.mxu0 0.0
    %1133 = vmatprep.subr.mxu0 0.0
    %1134 = vmatpush1.msra.mxu0 0.0
    %1135 = vmatprep.subr.mxu0 0.0
    %1136 = vmatpush1.msra.mxu0 0.0
    %1137 = vmatprep.subr.mxu0 0.0
    %1138 = vmatpush1.msra.mxu0 0.0
    %1139 = vmatprep.subr.mxu0 0.0
    %1140 = vmatpush1.msra.mxu0 0.0
    %1141 = vmatprep.subr.mxu0 0.0
    %1142 = vmatpush1.msra.mxu0 0.0
    %1143 = vmatprep.subr.mxu0 0.0
    %1144 = vmatpush1.msra.mxu0 0.0
    %1145 = vmatprep.subr.mxu0 0.0
    %1146 = vmatpush1.msra.mxu0 0.0
    %1147 = vmatprep.subr.mxu0 0.0
    %1148 = vmatpush1.msra.mxu0 0.0
    %1149 = vmatprep.subr.mxu0 0.0
    %1150 = vmatpush1.msra.mxu0 0.0
    %1151 = vmatprep.subr.mxu0 0.0
    %1152 = vmatpush1.msra.mxu0 0.0
    %1153 = vmatprep.mubr.f32.mxu0 0.0
    %1154 = vmatmul.mubr.f32.gmra.mrb[0].mxu0 %v1063
    %v1155 = vpop.f32.mrb[0].mxu0
    %v1156 = vadd.f32 0.0, %v1155
    %v1157 = vpop.f32.mrb[0].mxu0
    %v1158 = vadd.f32 0.0, %v1157
    %1159 = vmatprep.mubr.f32.mxu0 0.0
    %1160 = vmatmul.mubr.f32.gmra.mrb[0].mxu0 %v1066
    %v1161 = vpop.f32.mrb[0].mxu0
    %v1162 = vadd.f32 0.0, %v1161
    %v1163 = vpop.f32.mrb[0].mxu0
    %v1164 = vadd.f32 0.0, %v1163
    %1165 = vdwg.mxu0
    %1166 = vmatprep.subr.mxu0 %v1044
    %1167 = vmatpush1.msra.mxu0 %v1043
    %1168 = vmatprep.subr.mxu0 %v1051
    %1169 = vmatpush1.msra.mxu0 %v1050
    %1170 = vmatprep.subr.mxu0 %v1078
    %1171 = vmatpush1.msra.mxu0 %v1075
    %1172 = vmatprep.subr.mxu0 0.0
    %1173 = vmatpush1.msra.mxu0 0.0
    %1174 = vmatprep.subr.mxu0 0.0
    %1175 = vmatpush1.msra.mxu0 0.0
    %1176 = vmatprep.subr.mxu0 0.0
    %1177 = vmatpush1.msra.mxu0 0.0
    %1178 = vmatprep.subr.mxu0 0.0
    %1179 = vmatpush1.msra.mxu0 0.0
    %1180 = vmatprep.subr.mxu0 0.0
    %1181 = vmatpush1.msra.mxu0 0.0
    %1182 = vmatprep.subr.mxu0 0.0
    %1183 = vmatpush1.msra.mxu0 0.0
    %1184 = vmatprep.subr.mxu0 0.0
    %1185 = vmatpush1.msra.mxu0 0.0
    %1186 = vmatprep.subr.mxu0 0.0
    %1187 = vmatpush1.msra.mxu0 0.0
    %1188 = vmatprep.subr.mxu0 0.0
    %1189 = vmatpush1.msra.mxu0 0.0
    %1190 = vmatprep.subr.mxu0 0.0
    %1191 = vmatpush1.msra.mxu0 0.0
    %1192 = vmatprep.subr.mxu0 0.0
    %1193 = vmatpush1.msra.mxu0 0.0
    %1194 = vmatprep.subr.mxu0 0.0
    %1195 = vmatpush1.msra.mxu0 0.0
    %1196 = vmatprep.subr.mxu0 0.0
    %1197 = vmatpush1.msra.mxu0 0.0
    %1198 = vmatprep.subr.mxu0 0.0
    %1199 = vmatpush1.msra.mxu0 0.0
    %1200 = vmatprep.subr.mxu0 0.0
    %1201 = vmatpush1.msra.mxu0 0.0
    %1202 = vmatprep.subr.mxu0 0.0
    %1203 = vmatpush1.msra.mxu0 0.0
    %1204 = vmatprep.subr.mxu0 0.0
    %1205 = vmatpush1.msra.mxu0 0.0
    %1206 = vmatprep.subr.mxu0 0.0
    %1207 = vmatpush1.msra.mxu0 0.0
    %1208 = vmatprep.subr.mxu0 0.0
    %1209 = vmatpush1.msra.mxu0 0.0
    %1210 = vmatprep.subr.mxu0 0.0
    %1211 = vmatpush1.msra.mxu0 0.0
    %1212 = vmatprep.subr.mxu0 0.0
    %1213 = vmatpush1.msra.mxu0 0.0
    %1214 = vmatprep.subr.mxu0 0.0
    %1215 = vmatpush1.msra.mxu0 0.0
    %1216 = vmatprep.subr.mxu0 0.0
    %1217 = vmatpush1.msra.mxu0 0.0
    %1218 = vmatprep.subr.mxu0 0.0
    %1219 = vmatpush1.msra.mxu0 0.0
    %1220 = vmatprep.subr.mxu0 0.0
    %1221 = vmatpush1.msra.mxu0 0.0
    %1222 = vmatprep.subr.mxu0 0.0
    %1223 = vmatpush1.msra.mxu0 0.0
    %1224 = vmatprep.subr.mxu0 0.0
    %1225 = vmatpush1.msra.mxu0 0.0
    %1226 = vmatprep.subr.mxu0 0.0
    %1227 = vmatpush1.msra.mxu0 0.0
    %1228 = vmatprep.subr.mxu0 0.0
    %1229 = vmatpush1.msra.mxu0 0.0
    %1230 = vmatprep.mubr.f32.mxu0 0.0
    %1231 = vmatmul.mubr.f32.gmra.mrb[0].mxu0 %v1063
    %v1232 = vpop.f32.mrb[0].mxu0
    %v1233 = vadd.f32 0.0, %v1232
    %v1234 = vpop.f32.mrb[0].mxu0
    %v1235 = vadd.f32 0.0, %v1234
    %1236 = vmatprep.mubr.f32.mxu0 0.0
    %1237 = vmatmul.mubr.f32.gmra.mrb[0].mxu0 %v1066
    %v1238 = vpop.f32.mrb[0].mxu0
    %v1239 = vadd.f32 0.0, %v1238
    %v1240 = vpop.f32.mrb[0].mxu0
    %v1241 = vadd.f32 0.0, %v1240
    %1242 = vdwg.mxu0
    %1243 = vmatprep.subr.mxu0 %v1046
    %1244 = vmatpush1.msra.mxu0 %v1045
    %1245 = vmatprep.subr.mxu0 %v1053
    %1246 = vmatpush1.msra.mxu0 %v1052
    %1247 = vmatprep.subr.mxu0 %v1084
    %1248 = vmatpush1.msra.mxu0 %v1081
    %1249 = vmatprep.subr.mxu0 0.0
    %1250 = vmatpush1.msra.mxu0 0.0
    %1251 = vmatprep.subr.mxu0 0.0
    %1252 = vmatpush1.msra.mxu0 0.0
    %1253 = vmatprep.subr.mxu0 0.0
    %1254 = vmatpush1.msra.mxu0 0.0
    %1255 = vmatprep.subr.mxu0 0.0
    %1256 = vmatpush1.msra.mxu0 0.0
    %1257 = vmatprep.subr.mxu0 0.0
    %1258 = vmatpush1.msra.mxu0 0.0
    %1259 = vmatprep.subr.mxu0 0.0
    %1260 = vmatpush1.msra.mxu0 0.0
    %1261 = vmatprep.subr.mxu0 0.0
    %1262 = vmatpush1.msra.mxu0 0.0
    %1263 = vmatprep.subr.mxu0 0.0
    %1264 = vmatpush1.msra.mxu0 0.0
    %1265 = vmatprep.subr.mxu0 0.0
    %1266 = vmatpush1.msra.mxu0 0.0
    %1267 = vmatprep.subr.mxu0 0.0
    %1268 = vmatpush1.msra.mxu0 0.0
    %1269 = vmatprep.subr.mxu0 0.0
    %1270 = vmatpush1.msra.mxu0 0.0
    %1271 = vmatprep.subr.mxu0 0.0
    %1272 = vmatpush1.msra.mxu0 0.0
    %1273 = vmatprep.subr.mxu0 0.0
    %1274 = vmatpush1.msra.mxu0 0.0
    %1275 = vmatprep.subr.mxu0 0.0
    %1276 = vmatpush1.msra.mxu0 0.0
    %1277 = vmatprep.subr.mxu0 0.0
    %1278 = vmatpush1.msra.mxu0 0.0
    %1279 = vmatprep.subr.mxu0 0.0
    %1280 = vmatpush1.msra.mxu0 0.0
    %1281 = vmatprep.subr.mxu0 0.0
    %1282 = vmatpush1.msra.mxu0 0.0
    %1283 = vmatprep.subr.mxu0 0.0
    %1284 = vmatpush1.msra.mxu0 0.0
    %1285 = vmatprep.subr.mxu0 0.0
    %1286 = vmatpush1.msra.mxu0 0.0
    %1287 = vmatprep.subr.mxu0 0.0
    %1288 = vmatpush1.msra.mxu0 0.0
    %1289 = vmatprep.subr.mxu0 0.0
    %1290 = vmatpush1.msra.mxu0 0.0
    %1291 = vmatprep.subr.mxu0 0.0
    %1292 = vmatpush1.msra.mxu0 0.0
    %1293 = vmatprep.subr.mxu0 0.0
    %1294 = vmatpush1.msra.mxu0 0.0
    %1295 = vmatprep.subr.mxu0 0.0
    %1296 = vmatpush1.msra.mxu0 0.0
    %1297 = vmatprep.subr.mxu0 0.0
    %1298 = vmatpush1.msra.mxu0 0.0
    %1299 = vmatprep.subr.mxu0 0.0
    %1300 = vmatpush1.msra.mxu0 0.0
    %1301 = vmatprep.subr.mxu0 0.0
    %1302 = vmatpush1.msra.mxu0 0.0
    %1303 = vmatprep.subr.mxu0 0.0
    %1304 = vmatpush1.msra.mxu0 0.0
    %1305 = vmatprep.subr.mxu0 0.0
    %1306 = vmatpush1.msra.mxu0 0.0
    %1307 = vmatprep.mubr.f32.mxu0 0.0
    %1308 = vmatmul.mubr.f32.gmra.mrb[0].mxu0 %v1063
    %v1309 = vpop.f32.mrb[0].mxu0
    %v1310 = vadd.f32 0.0, %v1309
    %v1311 = vpop.f32.mrb[0].mxu0
    %v1312 = vadd.f32 0.0, %v1311
    %1313 = vmatprep.mubr.f32.mxu0 0.0
    %1314 = vmatmul.mubr.f32.gmra.mrb[0].mxu0 %v1066
    %v1315 = vpop.f32.mrb[0].mxu0
    %v1316 = vadd.f32 0.0, %v1315
    %v1317 = vpop.f32.mrb[0].mxu0
    %v1318 = vadd.f32 0.0, %v1317
    %1319 = vdwg.mxu0
    %1320 = vmatprep.subr.mxu0 0.0
    %1321 = vmatpush1.msra.mxu0 %v1047
    %1322 = vmatprep.subr.mxu0 0.0
    %1323 = vmatpush1.msra.mxu0 %v1054
    %1324 = vmatprep.subr.mxu0 0.0
    %1325 = vmatpush1.msra.mxu0 %v1087
    %1326 = vmatprep.subr.mxu0 0.0
    %1327 = vmatpush1.msra.mxu0 0.0
    %1328 = vmatprep.subr.mxu0 0.0
    %1329 = vmatpush1.msra.mxu0 0.0
    %1330 = vmatprep.subr.mxu0 0.0
    %1331 = vmatpush1.msra.mxu0 0.0
    %1332 = vmatprep.subr.mxu0 0.0
    %1333 = vmatpush1.msra.mxu0 0.0
    %1334 = vmatprep.subr.mxu0 0.0
    %1335 = vmatpush1.msra.mxu0 0.0
    %1336 = vmatprep.subr.mxu0 0.0
    %1337 = vmatpush1.msra.mxu0 0.0
    %1338 = vmatprep.subr.mxu0 0.0
    %1339 = vmatpush1.msra.mxu0 0.0
    %1340 = vmatprep.subr.mxu0 0.0
    %1341 = vmatpush1.msra.mxu0 0.0
    %1342 = vmatprep.subr.mxu0 0.0
    %1343 = vmatpush1.msra.mxu0 0.0
    %1344 = vmatprep.subr.mxu0 0.0
    %1345 = vmatpush1.msra.mxu0 0.0
    %1346 = vmatprep.subr.mxu0 0.0
    %1347 = vmatpush1.msra.mxu0 0.0
    %1348 = vmatprep.subr.mxu0 0.0
    %1349 = vmatpush1.msra.mxu0 0.0
    %1350 = vmatprep.subr.mxu0 0.0
    %1351 = vmatpush1.msra.mxu0 0.0
    %1352 = vmatprep.subr.mxu0 0.0
    %1353 = vmatpush1.msra.mxu0 0.0
    %1354 = vmatprep.subr.mxu0 0.0
    %1355 = vmatpush1.msra.mxu0 0.0
    %1356 = vmatprep.subr.mxu0 0.0
    %1357 = vmatpush1.msra.mxu0 0.0
    %1358 = vmatprep.subr.mxu0 0.0
    %1359 = vmatpush1.msra.mxu0 0.0
    %1360 = vmatprep.subr.mxu0 0.0
    %1361 = vmatpush1.msra.mxu0 0.0
    %1362 = vmatprep.subr.mxu0 0.0
    %1363 = vmatpush1.msra.mxu0 0.0
    %1364 = vmatprep.subr.mxu0 0.0
    %1365 = vmatpush1.msra.mxu0 0.0
    %1366 = vmatprep.subr.mxu0 0.0
    %1367 = vmatpush1.msra.mxu0 0.0
    %1368 = vmatprep.subr.mxu0 0.0
    %1369 = vmatpush1.msra.mxu0 0.0
    %1370 = vmatprep.subr.mxu0 0.0
    %1371 = vmatpush1.msra.mxu0 0.0
    %1372 = vmatprep.subr.mxu0 0.0
    %1373 = vmatpush1.msra.mxu0 0.0
    %1374 = vmatprep.subr.mxu0 0.0
    %1375 = vmatpush1.msra.mxu0 0.0
    %1376 = vmatprep.subr.mxu0 0.0
    %1377 = vmatpush1.msra.mxu0 0.0
    %1378 = vmatprep.subr.mxu0 0.0
    %1379 = vmatpush1.msra.mxu0 0.0
    %1380 = vmatprep.subr.mxu0 0.0
    %1381 = vmatpush1.msra.mxu0 0.0
    %1382 = vmatprep.subr.mxu0 0.0
    %1383 = vmatpush1.msra.mxu0 0.0
    %1384 = vmatprep.mubr.f32.mxu0 0.0
    %1385 = vmatmul.mubr.f32.gmra.mrb[0].mxu0 %v1063
    %v1386 = vpop.f32.mrb[0].mxu0
    %v1387 = vadd.f32 0.0, %v1386
    %v1388 = vpop.f32.mrb[0].mxu0
    %1389 = vmatprep.mubr.f32.mxu0 0.0
    %1390 = vmatmul.mubr.f32.gmra.mrb[0].mxu0 %v1066
    %v1391 = vpop.f32.mrb[0].mxu0
    %v1392 = vadd.f32 0.0, %v1391
    %v1393 = vpop.f32.mrb[0].mxu0
    %1394 = vdwg.mxu0
    %v1395 = vld [vmem:[%s9] sm:$0x7]
    %v1396 = vld [vmem:[%s10] sm:$0x7]
    %v1397 = vmul.f32 %v946, %v1395
    %v1398 = vsub.f32 %v1396, %v1397
    %1400 = vset.pattern.permute.xlu0 0
    %1401 = vperm.xlu0 %1400, %v1395
    %v1402 = vpop.permute.xlu0 %1401
    %v1404 = vmul.f32 %v948, %v1402
    %1406 = vset.pattern.permute.xlu0 0
    %1407 = vperm.xlu0 %1406, %v1398
    %v1408 = vpop.permute.xlu0 %1407
    %v1410 = vadd.f32 %v1404, %v1408
    %vm1411 = vcmask 165888
    %1412 = vst.msk [vmem:[#allocation14] sm:$0x7] %vm1411, %v1410
    %v1417 = vlaneseq
    %v1418 = vshrl.u32 %v1417, 7
    %v1419 = vsub.s32 0, %v1418
    %v1420 = vrot.slane %v726, %v1419
    %v1421 = vlaneseq
    %v1422 = vshrl.u32 %v1421, 7
    %v1423 = vsub.s32 4, %v1422
    %v1424 = vrot.slane %v726, %v1423
    %v1425 = vlaneseq
    %v1426 = vshrl.u32 %v1425, 7
    %v1427 = vsub.s32 0, %v1426
    %v1428 = vrot.slane %v727, %v1427
    %v1429 = vlaneseq
    %v1430 = vshrl.u32 %v1429, 7
    %v1431 = vsub.s32 4, %v1430
    %v1432 = vrot.slane %v727, %v1431
    %v1433 = vlaneseq
    %v1434 = vshrl.u32 %v1433, 7
    %v1435 = vsub.s32 0, %v1434
    %v1436 = vrot.slane %v728, %v1435
    %v1437 = vlaneseq
    %v1438 = vshrl.u32 %v1437, 7
    %v1439 = vsub.s32 4, %v1438
    %v1440 = vrot.slane %v728, %v1439
    %v1441 = vlaneseq
    %v1442 = vshrl.u32 %v1441, 7
    %v1443 = vsub.s32 0, %v1442
    %v1444 = vrot.slane %v729, %v1443
    %v1452 = vlaneseq
    %v1453 = vshrl.u32 %v1452, 7
    %v1454 = vsub.s32 0, %v1453
    %v1455 = vrot.slane %v1420, %v1454
    %v1456 = vlaneseq
    %v1457 = vshrl.u32 %v1456, 7
    %v1458 = vsub.s32 0, %v1457
    %v1459 = vrot.slane %v1424, %v1458
    %v1460 = vlaneseq
    %v1461 = vshrl.u32 %v1460, 7
    %v1462 = vsub.s32 0, %v1461
    %v1463 = vrot.slane %v1428, %v1462
    %v1464 = vlaneseq
    %v1465 = vshrl.u32 %v1464, 7
    %v1466 = vsub.s32 0, %v1465
    %v1467 = vrot.slane %v1432, %v1466
    %v1468 = vlaneseq
    %v1469 = vshrl.u32 %v1468, 7
    %v1470 = vsub.s32 0, %v1469
    %v1471 = vrot.slane %v1436, %v1470
    %v1472 = vlaneseq
    %v1473 = vshrl.u32 %v1472, 7
    %v1474 = vsub.s32 0, %v1473
    %v1475 = vrot.slane %v1440, %v1474
    %v1476 = vlaneseq
    %v1477 = vshrl.u32 %v1476, 7
    %v1478 = vsub.s32 0, %v1477
    %v1479 = vrot.slane %v1444, %v1478
    %v1480 = vmul.f32 %v1156, %v1455
    %v1481 = vmul.f32 %v1158, %v1459
    %v1482 = vmul.f32 %v1233, %v1463
    %v1483 = vmul.f32 %v1235, %v1467
    %v1484 = vmul.f32 %v1310, %v1471
    %v1485 = vmul.f32 %v1312, %v1475
    %v1486 = vmul.f32 %v1387, %v1479
    %v1487 = vlaneseq
    %v1488 = vshrl.u32 %v1487, 7
    %v1489 = vsub.s32 1, %v1488
    %v1490 = vrot.slane %v726, %v1489
    %v1491 = vlaneseq
    %v1492 = vshrl.u32 %v1491, 7
    %v1493 = vsub.s32 5, %v1492
    %v1494 = vrot.slane %v726, %v1493
    %v1495 = vlaneseq
    %v1496 = vshrl.u32 %v1495, 7
    %v1497 = vsub.s32 1, %v1496
    %v1498 = vrot.slane %v727, %v1497
    %v1499 = vlaneseq
    %v1500 = vshrl.u32 %v1499, 7
    %v1501 = vsub.s32 5, %v1500
    %v1502 = vrot.slane %v727, %v1501
    %v1503 = vlaneseq
    %v1504 = vshrl.u32 %v1503, 7
    %v1505 = vsub.s32 1, %v1504
    %v1506 = vrot.slane %v728, %v1505
    %v1507 = vlaneseq
    %v1508 = vshrl.u32 %v1507, 7
    %v1509 = vsub.s32 5, %v1508
    %v1510 = vrot.slane %v728, %v1509
    %v1511 = vlaneseq
    %v1512 = vshrl.u32 %v1511, 7
    %v1513 = vsub.s32 1, %v1512
    %v1514 = vrot.slane %v729, %v1513
    %v1522 = vlaneseq
    %v1523 = vshrl.u32 %v1522, 7
    %v1524 = vsub.s32 1, %v1523
    %v1525 = vrot.slane %v1490, %v1524
    %v1526 = vlaneseq
    %v1527 = vshrl.u32 %v1526, 7
    %v1528 = vsub.s32 1, %v1527
    %v1529 = vrot.slane %v1494, %v1528
    %v1530 = vlaneseq
    %v1531 = vshrl.u32 %v1530, 7
    %v1532 = vsub.s32 1, %v1531
    %v1533 = vrot.slane %v1498, %v1532
    %v1534 = vlaneseq
    %v1535 = vshrl.u32 %v1534, 7
    %v1536 = vsub.s32 1, %v1535
    %v1537 = vrot.slane %v1502, %v1536
    %v1538 = vlaneseq
    %v1539 = vshrl.u32 %v1538, 7
    %v1540 = vsub.s32 1, %v1539
    %v1541 = vrot.slane %v1506, %v1540
    %v1542 = vlaneseq
    %v1543 = vshrl.u32 %v1542, 7
    %v1544 = vsub.s32 1, %v1543
    %v1545 = vrot.slane %v1510, %v1544
    %v1546 = vlaneseq
    %v1547 = vshrl.u32 %v1546, 7
    %v1548 = vsub.s32 1, %v1547
    %v1549 = vrot.slane %v1514, %v1548
    %v1550 = vmul.f32 %v1156, %v1525
    %v1551 = vmul.f32 %v1158, %v1529
    %v1552 = vmul.f32 %v1233, %v1533
    %v1553 = vmul.f32 %v1235, %v1537
    %v1554 = vmul.f32 %v1310, %v1541
    %v1555 = vmul.f32 %v1312, %v1545
    %v1556 = vmul.f32 %v1387, %v1549
    %v1564 = vrot.slane %v1550, 3
    %v1565 = vrot.slane %v1551, 3
    %v1566 = vrot.slane %v1552, 3
    %v1567 = vrot.slane %v1553, 3
    %v1568 = vrot.slane %v1554, 3
    %v1569 = vrot.slane %v1555, 3
    %v1570 = vrot.slane %v1556, 3
    %v1578 = vadd.f32 %v1480, %v1564
    %v1579 = vadd.f32 %v1481, %v1565
    %v1580 = vadd.f32 %v1482, %v1566
    %v1581 = vadd.f32 %v1483, %v1567
    %v1582 = vadd.f32 %v1484, %v1568
    %v1583 = vadd.f32 %v1485, %v1569
    %v1584 = vadd.f32 %v1486, %v1570
    %v1585 = vlaneseq
    %v1586 = vshrl.u32 %v1585, 7
    %v1587 = vsub.s32 2, %v1586
    %v1588 = vrot.slane %v726, %v1587
    %v1589 = vlaneseq
    %v1590 = vshrl.u32 %v1589, 7
    %v1591 = vsub.s32 6, %v1590
    %v1592 = vrot.slane %v726, %v1591
    %v1593 = vlaneseq
    %v1594 = vshrl.u32 %v1593, 7
    %v1595 = vsub.s32 2, %v1594
    %v1596 = vrot.slane %v727, %v1595
    %v1597 = vlaneseq
    %v1598 = vshrl.u32 %v1597, 7
    %v1599 = vsub.s32 6, %v1598
    %v1600 = vrot.slane %v727, %v1599
    %v1601 = vlaneseq
    %v1602 = vshrl.u32 %v1601, 7
    %v1603 = vsub.s32 2, %v1602
    %v1604 = vrot.slane %v728, %v1603
    %v1605 = vlaneseq
    %v1606 = vshrl.u32 %v1605, 7
    %v1607 = vsub.s32 6, %v1606
    %v1608 = vrot.slane %v728, %v1607
    %v1609 = vlaneseq
    %v1610 = vshrl.u32 %v1609, 7
    %v1611 = vsub.s32 2, %v1610
    %v1612 = vrot.slane %v729, %v1611
    %v1620 = vlaneseq
    %v1621 = vshrl.u32 %v1620, 7
    %v1622 = vsub.s32 2, %v1621
    %v1623 = vrot.slane %v1588, %v1622
    %v1624 = vlaneseq
    %v1625 = vshrl.u32 %v1624, 7
    %v1626 = vsub.s32 2, %v1625
    %v1627 = vrot.slane %v1592, %v1626
    %v1628 = vlaneseq
    %v1629 = vshrl.u32 %v1628, 7
    %v1630 = vsub.s32 2, %v1629
    %v1631 = vrot.slane %v1596, %v1630
    %v1632 = vlaneseq
    %v1633 = vshrl.u32 %v1632, 7
    %v1634 = vsub.s32 2, %v1633
    %v1635 = vrot.slane %v1600, %v1634
    %v1636 = vlaneseq
    %v1637 = vshrl.u32 %v1636, 7
    %v1638 = vsub.s32 2, %v1637
    %v1639 = vrot.slane %v1604, %v1638
    %v1640 = vlaneseq
    %v1641 = vshrl.u32 %v1640, 7
    %v1642 = vsub.s32 2, %v1641
    %v1643 = vrot.slane %v1608, %v1642
    %v1644 = vlaneseq
    %v1645 = vshrl.u32 %v1644, 7
    %v1646 = vsub.s32 2, %v1645
    %v1647 = vrot.slane %v1612, %v1646
    %v1648 = vmul.f32 %v1156, %v1623
    %v1649 = vmul.f32 %v1158, %v1627
    %v1650 = vmul.f32 %v1233, %v1631
    %v1651 = vmul.f32 %v1235, %v1635
    %v1652 = vmul.f32 %v1310, %v1639
    %v1653 = vmul.f32 %v1312, %v1643
    %v1654 = vmul.f32 %v1387, %v1647
    %v1655 = vmul.f32 %v1162, %v1623
    %v1656 = vmul.f32 %v1164, %v1627
    %v1657 = vmul.f32 %v1239, %v1631
    %v1658 = vmul.f32 %v1241, %v1635
    %v1659 = vmul.f32 %v1316, %v1639
    %v1660 = vmul.f32 %v1318, %v1643
    %v1661 = vmul.f32 %v1392, %v1647
    %v1676 = vrot.slane %v1648, 6
    %v1677 = vrot.slane %v1655, 6
    %v1678 = vsel %vm860, %v1676, %v1677
    %v1679 = vrot.slane %v1649, 6
    %v1680 = vrot.slane %v1656, 6
    %v1681 = vsel %vm860, %v1679, %v1680
    %v1682 = vrot.slane %v1650, 6
    %v1683 = vrot.slane %v1657, 6
    %v1684 = vsel %vm860, %v1682, %v1683
    %v1685 = vrot.slane %v1651, 6
    %v1686 = vrot.slane %v1658, 6
    %v1687 = vsel %vm860, %v1685, %v1686
    %v1688 = vrot.slane %v1652, 6
    %v1689 = vrot.slane %v1659, 6
    %v1690 = vsel %vm860, %v1688, %v1689
    %v1691 = vrot.slane %v1653, 6
    %v1692 = vrot.slane %v1660, 6
    %v1693 = vsel %vm860, %v1691, %v1692
    %v1694 = vrot.slane %v1654, 6
    %v1695 = vrot.slane %v1661, 6
    %v1696 = vsel %vm860, %v1694, %v1695
    %v1704 = vadd.f32 %v1578, %v1678
    %v1705 = vadd.f32 %v1579, %v1681
    %v1706 = vadd.f32 %v1580, %v1684
    %v1707 = vadd.f32 %v1581, %v1687
    %v1708 = vadd.f32 %v1582, %v1690
    %v1709 = vadd.f32 %v1583, %v1693
    %v1710 = vadd.f32 %v1584, %v1696
    %v1718 = vrot.slane %v1162, 1
    %v1719 = vrot.slane %v1164, 1
    %v1720 = vrot.slane %v1239, 1
    %v1721 = vrot.slane %v1241, 1
    %v1722 = vrot.slane %v1316, 1
    %v1723 = vrot.slane %v1318, 1
    %v1724 = vrot.slane %v1392, 1
    %v1732 = vadd.f32 %v1704, %v1718
    %v1733 = vadd.f32 %v1705, %v1719
    %v1734 = vadd.f32 %v1706, %v1720
    %v1735 = vadd.f32 %v1707, %v1721
    %v1736 = vadd.f32 %v1708, %v1722
    %v1737 = vadd.f32 %v1709, %v1723
    %v1738 = vadd.f32 %v1710, %v1724
    %v1739 = vadd.f32 %v1732, %v1408
    %v1740 = vadd.f32 %v1733, %v1408
    %v1741 = vadd.f32 %v1734, %v1408
    %v1742 = vadd.f32 %v1735, %v1408
    %v1743 = vadd.f32 %v1736, %v1408
    %v1744 = vadd.f32 %v1737, %v1408
    %v1745 = vadd.f32 %v1738, %v1408
    %v1752 = vcombine.low %v1739, %v1740
    %v1753 = vcombine.low %v1741, %v1742
    %v1754 = vcombine.low %v1743, %v1744
    %1758 = vst [vmem:[#allocation15] sm:$0x77] %v1752
    %1759 = vst [vmem:[#allocation15 + $0x8] sm:$0x77] %v1753
    %1760 = vst [vmem:[#allocation15 + $0x10] sm:$0x77] %v1754
    %vm1761 = vcmask 75776
    %1762 = vst.msk [vmem:[#allocation15 + $0x18] sm:$0x7] %vm1761, %v1745
    // Predicated region
    $region74: #{tpu_custom_call.1} parent=1 // pred_check
      _
    $region75: #{tpu_custom_call.1} parent=1 // pred_check_branch
      %1764 = sbr.rel (0) target = $region77
    $region76: #{tpu_custom_call.1} parent=1 // pred_region
      %s1766 = ssub.s32 64, 64
      %1767 = vsyncadd [#allocation4], %s1766
      %s1769 = sshll.u32 [#allocation14], 4
      %s1770 = int_to_ptr.vmem [resolvable:$true] %s1769
      %1772 = dma.vmem_to_hbm [thread:$0]  %s1770, 64, %s11, [#allocation4]
    $region77: #{tpu_custom_call.1} parent=1 // pred_fallthru
      _
    // Predicated region
    $region78: #{tpu_custom_call.1} parent=1 // pred_check
      _
    $region79: #{tpu_custom_call.1} parent=1 // pred_check_branch
      %1774 = sbr.rel (0) target = $region81
    $region80: #{tpu_custom_call.1} parent=1 // pred_region
      %s1776 = ssub.s32 448, 448
      %1777 = vsyncadd [#allocation16], %s1776
      %s1779 = sshll.u32 [#allocation15], 4
      %s1780 = int_to_ptr.vmem [resolvable:$true] %s1779
      %1782 = dma.vmem_to_hbm [thread:$0]  %s1780, 448, %s12, [#allocation16]
    $region81: #{tpu_custom_call.1} parent=1 // pred_fallthru
      _
    // Predicated region
    $region82: #{tpu_custom_call.1} parent=1 // pred_check
      _
    $region83: #{tpu_custom_call.1} parent=1 // pred_check_branch
      %1784 = sbr.rel (0) target = $region85
    $region84: #{tpu_custom_call.1} parent=1 // pred_region
      %1785 = dma.done [#allocation4], 64
    $region85: #{tpu_custom_call.1} parent=1 // pred_fallthru
      _
    // Predicated region
    $region86: #{tpu_custom_call.1} parent=1 // pred_check
      _
    $region87: #{tpu_custom_call.1} parent=1 // pred_check_branch
      %1787 = sbr.rel (0) target = $region89
    $region88: #{tpu_custom_call.1} parent=1 // pred_region
      %1788 = dma.done [#allocation16], 448
    $region89: #{tpu_custom_call.1} parent=1 // pred_fallthru
      _
    %1789 = vsyncpa [#allocation3], 1
    %1790 = vsyncpa [#allocation6], 1
    %1791 = vsyncpa [#allocation9], 1
    %1792 = vsyncpa [#allocation12], 1
    %1793 = vsyncpa [#allocation4], 1
    %1794 = vsyncpa [#allocation16], 1

</llo_original>
